<compile_context>
chip_gen: v6e
topology: v6e:2x2x1
jax: 0.10.0
libtpu: 0.0.40
codegen_flags: <defaults>
</compile_context>

<pallas_src>
import functools

import jax
import jax.numpy as jnp
from jax import lax
from jax.experimental import pallas as pl
from jax.experimental.pallas import tpu as pltpu

_MXU_DTYPE = jnp.bfloat16   # MXU operands; accumulation is always f32.

_N_CONV = 8     # conv1..conv8 (64 out-channels each, k=3, s=1, p=1)
_N_POOL = 4     # only conv1..conv4 are followed by MaxPool1d(3, 2, 1)
_CH = 64        # conv output channels
_N_GCN = 5
_N_FC = 3


def _rup(x, m):
    return ((x + m - 1) // m) * m


def _pool_len(l):
    # MaxPool1d(kernel=3, stride=2, padding=1)
    return (l - 1) // 2 + 1


def _fused_classifier_kernel(
        x_ref,      # [L*Np, 3*CH] bf16  im2col of the raw signal (conv1 input)
        adj_ref,    # [Np, Np]     f32   adj[dst, src] = 1 per edge
        cw14_ref,   # [4, 3*CH, CH] bf16 conv1..4 im2col weights
        cw58_ref,   # [4, CH, CH]   bf16 conv5..8 center-tap weights (L==1)
        cb_ref,     # [8, CH]       f32  conv biases
        gw_ref,     # [5, d_g, d_g] bf16 GCN weights (zero-padded)
        gb_ref,     # [5, d_g]      f32  GCN biases
        fw_ref,     # [3, d_f, d_f] bf16 FC weights (zero-padded)
        fb_ref,     # [3, d_f]      f32  FC biases
        out_ref,    # [1, n_classes] f32
        s0_ref,     # [L1*Np, 3*CH] f32  im2col scratch (ping)
        s1_ref,     # [L1*Np, 3*CH] f32  im2col scratch (pong)
        *, n_nodes, n_pad, length, n_classes, d_g, d_f):
    f32 = jnp.float32
    bf16 = _MXU_DTYPE
    Np = n_pad
    C = _CH

    # ---------------- conv1..conv4: Conv1d(3,1,1)+ReLU+MaxPool1d(3,2,1) ------
    # One fused im2col matmul per layer; pooled blocks are written straight
    # into the next layer's im2col scratch (no concatenates anywhere).
    scratch = (s0_ref, s1_ref)
    src_ref = None
    h = None
    L = length
    for li in range(_N_POOL):
        rows = L * Np
        if li == 0:
            a = x_ref[0:rows, :]                       # already bf16
        else:
            a = src_ref[0:rows, :].astype(bf16)        # one cast per layer
        acc = jnp.dot(a, cw14_ref[li], preferred_element_type=f32)
        y = jnp.maximum(acc + cb_ref[li:li + 1, :], 0.0)      # [rows, C] f32

        # MaxPool1d(3,2,1): output p covers input positions {2p-1, 2p, 2p+1};
        # out-of-range taps are skipped (== PyTorch's -inf padding).
        Lout = _pool_len(L)
        blocks = []
        for p in range(Lout):
            c0 = 2 * p
            m = y[c0 * Np:(c0 + 1) * Np, :]
            if c0 - 1 >= 0:
                m = jnp.maximum(m, y[(c0 - 1) * Np:c0 * Np, :])
            if c0 + 1 < L:
                m = jnp.maximum(m, y[(c0 + 1) * Np:(c0 + 2) * Np, :])
            blocks.append(m)

        if li < _N_POOL - 1:
            # Scatter pooled blocks into the next layer's im2col layout:
            # row block p gets [x(p-1) | x(p) | x(p+1)]; boundary slots = 0.
            dst = scratch[li % 2]
            zblk = jnp.zeros((Np, C), f32)
            dst[0:Np, 0:C] = zblk                                   # x(-1)
            dst[(Lout - 1) * Np:Lout * Np, 2 * C:3 * C] = zblk      # x(Lout)
            for p in range(Lout):
                m = blocks[p]
                dst[p * Np:(p + 1) * Np, C:2 * C] = m               # center
                if p + 1 < Lout:
                    dst[(p + 1) * Np:(p + 2) * Np, 0:C] = m         # left of p+1
                if p >= 1:
                    dst[(p - 1) * Np:p * Np, 2 * C:3 * C] = m       # right of p-1
            src_ref = dst
            L = Lout
        else:
            h = blocks[0]   # wrapper guarantees Lout == 1 here -> [Np, C] f32

    # ---------------- conv5..conv8 on a length-1 signal ----------------------
    # k=3, p=1 with L==1: the two side taps only see zero padding, so each
    # layer is exactly (center-tap linear) + bias + ReLU.
    hb = h.astype(bf16)
    for i in range(_N_CONV - _N_POOL):
        z = (jnp.dot(hb, cw58_ref[i], preferred_element_type=f32)
             + cb_ref[_N_POOL + i:_N_POOL + i + 1, :])
        hb = jnp.maximum(z, 0.0).astype(bf16)
    # torch.flatten(start_dim=1) with L_final == 1 is exactly this [Np, C].

    if d_g > C:
        hb = jnp.concatenate([hb, jnp.zeros((Np, d_g - C), bf16)], axis=1)

    # ---------------- 5 GCN layers: h <- (adj @ h) @ W + b (no activation) ---
    adjb = adj_ref[...].astype(bf16)                   # cast adj exactly once
    hf = None
    for i in range(_N_GCN):
        agg = jnp.dot(adjb, hb, preferred_element_type=f32)
        hf = (jnp.dot(agg.astype(bf16), gw_ref[i], preferred_element_type=f32)
              + gb_ref[i:i + 1, :])
        hb = hf.astype(bf16)

    # ---------------- dgl.mean_nodes (single graph => mean over real nodes) --
    if n_nodes == n_pad:
        hsum = jnp.sum(hf, axis=0, keepdims=True)
    else:
        node_ok = lax.broadcasted_iota(jnp.int32, (n_pad, 1), 0) < n_nodes
        hsum = jnp.sum(jnp.where(node_ok, hf, 0.0), axis=0, keepdims=True)
    hg = hsum * (1.0 / n_nodes)                        # [1, d_g] f32

    # ---------------- classify MLP: hidden -> 128 -> 64 -> n_classes ---------
    if d_f > d_g:
        hg = jnp.concatenate([hg, jnp.zeros((1, d_f - d_g), f32)], axis=1)
    xb = hg.astype(bf16)
    z = None
    for i in range(_N_FC):
        z = jnp.dot(xb, fw_ref[i], preferred_element_type=f32) + fb_ref[i:i + 1, :]
        if i < _N_FC - 1:
            xb = jnp.maximum(z, 0.0).astype(bf16)

    out_ref[...] = z[:, 0:n_classes]


# -----------------------------------------------------------------------------
# Wrapper: one-time layout plumbing (im2col, slab packing) + single pallas_call
# -----------------------------------------------------------------------------
def classifier_forward(params, node_feats, adj):
    """Forward pass of Classifier for a single graph.

    node_feats: [N, 3, L]  (g.ndata['h'], NCL layout)
    adj:        [N, N]     adj[dst, src] = 1.0 per edge -> reproduces
                           update_all(copy_src('h'), sum('m'))
    """
    N, c_in, L = node_feats.shape
    assert c_in <= _CH
    Np = _rup(N, 8)                                   # keep row shifts 8-aligned

    Lf = L
    for _ in range(_N_POOL):
        Lf = _pool_len(Lf)
    assert Lf == 1, "kernel assumes the length pools down to 1 (e.g. L=16)"
    # TODO(synk): flatten for L_final > 1 (channel-major interleave) is not
    # implemented; the assert above enforces L_final == 1.

    hidden = params["gcns"][0][0].shape[0]
    in_dim = params["gcns"][0][0].shape[1]
    n_classes = params["fc3"][0].shape[0]
    assert in_dim == _CH * Lf, "GCN in_dim must equal flattened conv features"
    d_g = max(_CH, _rup(hidden, 64))
    d_f = max(128, _rup(hidden, 64), _rup(n_classes, 64))

    f32, bf16 = jnp.float32, _MXU_DTYPE

    # ---- input im2col: rows = (position l, node n) with n fastest -----------
    xt = jnp.transpose(node_feats.astype(f32), (2, 0, 1))           # [L, N, Cin]
    xt = jnp.pad(xt, ((0, 0), (0, Np - N), (0, _CH - c_in)))        # [L, Np, C]
    xp = jnp.pad(xt, ((1, 1), (0, 0), (0, 0)))                      # [L+2, Np, C]
    x_im = jnp.concatenate([xp[0:L], xp[1:L + 1], xp[2:L + 2]], -1)  # [L, Np, 3C]
    x_im = x_im.reshape(L * Np, 3 * _CH).astype(bf16)

    adj_p = jnp.zeros((Np, Np), f32).at[:N, :N].set(adj.astype(f32))

    # ---- packed weight slabs (9 DMAs total instead of 34) -------------------
    cw14 = []
    for i in range(_N_POOL):
        w, _ = params["convs"][i]                                   # [C, Cin_i, 3]
        ws = jnp.transpose(w, (2, 1, 0))                            # [3, Cin_i, C]
        ws = jnp.pad(ws, ((0, 0), (0, _CH - ws.shape[1]), (0, 0)))  # [3, C, C]
        cw14.append(ws.reshape(3 * _CH, _CH))
    cw14 = jnp.stack(cw14).astype(bf16)                             # [4, 3C, C]
    cw58 = jnp.stack([params["convs"][_N_POOL + i][0][:, :, 1].T
                      for i in range(_N_CONV - _N_POOL)]).astype(bf16)  # [4, C, C]
    cb = jnp.stack([params["convs"][i][1]
                    for i in range(_N_CONV)]).astype(f32)           # [8, C]

    gw = jnp.stack([jnp.pad(w.T, ((0, d_g - w.shape[1]), (0, d_g - w.shape[0])))
                    for (w, _) in params["gcns"]]).astype(bf16)     # [5, d_g, d_g]
    gb = jnp.stack([jnp.pad(b, (0, d_g - b.shape[0]))
                    for (_, b) in params["gcns"]]).astype(f32)      # [5, d_g]

    fcs = [params["fc1"], params["fc2"], params["fc3"]]
    fw = jnp.stack([jnp.pad(w.T, ((0, d_f - w.shape[1]), (0, d_f - w.shape[0])))
                    for (w, _) in fcs]).astype(bf16)                # [3, d_f, d_f]
    fb = jnp.stack([jnp.pad(b, (0, d_f - b.shape[0]))
                    for (_, b) in fcs]).astype(f32)                 # [3, d_f]

    L1 = _pool_len(L)
    vmem = pl.BlockSpec(memory_space=pltpu.MemorySpace.VMEM)
    kernel = functools.partial(
        _fused_classifier_kernel, n_nodes=N, n_pad=Np, length=L,
        n_classes=n_classes, d_g=d_g, d_f=d_f)
    return pl.pallas_call(
        kernel,
        out_shape=jax.ShapeDtypeStruct((1, n_classes), jnp.float32),
        in_specs=[vmem] * 9,
        out_specs=vmem,
        scratch_shapes=[pltpu.VMEM((L1 * Np, 3 * _CH), jnp.float32),
                        pltpu.VMEM((L1 * Np, 3 * _CH), jnp.float32)],
    )(x_im, adj_p, cw14, cw58, cb, gw, gb, fw, fb)


# -----------------------------------------------------------------------------
# Parameters (PyTorch-default init: U(-1/sqrt(fan_in), 1/sqrt(fan_in)))
# -----------------------------------------------------------------------------
def init_params(key, in_dim, hidden_dim, n_classes):
    ks = iter(jax.random.split(key, 64))

    def _uniform(k, shape, bound):
        return jax.random.uniform(k, shape, jnp.float32, -bound, bound)

    def linear(fan_in, fan_out):
        bound = 1.0 / (fan_in ** 0.5)
        return (_uniform(next(ks), (fan_out, fan_in), bound),
                _uniform(next(ks), (fan_out,), bound))

    def conv(cin, cout, k=3):
        bound = 1.0 / ((cin * k) ** 0.5)
        return (_uniform(next(ks), (cout, cin, k), bound),
                _uniform(next(ks), (cout,), bound))

    params = {}
    convs, cin = [], 3
    for _ in range(_N_CONV):
        convs.append(conv(cin, _CH))
        cin = _CH
    params["convs"] = convs

    dims = [in_dim] + [hidden_dim] * _N_GCN
    params["gcns"] = [linear(dims[i], dims[i + 1]) for i in range(_N_GCN)]

    params["fc1"] = linear(hidden_dim, 128)
    params["fc2"] = linear(128, 64)
    params["fc3"] = linear(64, n_classes)
    return params


# -----------------------------------------------------------------------------
# Pure-JAX reference (for a loose numerical sanity check; bf16 MXU operands in
# the kernel mean it will not match bit-for-bit).
# -----------------------------------------------------------------------------
def _reference_forward(params, node_feats, adj):
    x = node_feats.astype(jnp.float32)                       # [N, Cin, L]
    for i, (w, b) in enumerate(params["convs"]):
        x = lax.conv_general_dilated(x, w, (1,), [(1, 1)],
                                     dimension_numbers=("NCH", "OIH", "NCH"))
        x = jax.nn.relu(x + b[None, :, None])
        if i < _N_POOL:
            x = lax.reduce_window(x, -jnp.inf, lax.max,
                                  (1, 1, 3), (1, 1, 2),
                                  [(0, 0), (0, 0), (1, 1)])
    h = x.reshape(x.shape[0], -1)
    for (w, b) in params["gcns"]:
        h = (adj @ h) @ w.T + b
    hg = jnp.mean(h, axis=0, keepdims=True)
    for i, name in enumerate(("fc1", "fc2", "fc3")):
        w, b = params[name]
        hg = hg @ w.T + b
        if i < _N_FC - 1:
            hg = jax.nn.relu(hg)
    return hg


# -----------------------------------------------------------------------------
if __name__ == "__main__":
    # Shapes implied by the module: N nodes, per-node signal [3 channels, L=16];
    # 4 maxpools: 16 -> 8 -> 4 -> 2 -> 1, flattened feature = 64 = in_dim.
    N_NODES, C_IN, LENGTH = 8, 3, 16
    IN_DIM, HIDDEN_DIM, N_CLASSES = 64, 32, 5

    key = jax.random.PRNGKey(0)
    k_x, k_p = jax.random.split(key)
    node_feats = jax.random.normal(k_x, (N_NODES, C_IN, LENGTH), jnp.float32)

    # Deterministic graph: ring with self-loops; adj[dst, src] = 1.0
    idx = jnp.arange(N_NODES)
    adj = (jnp.zeros((N_NODES, N_NODES), jnp.float32)
           .at[idx, idx].set(1.0)
           .at[idx, (idx + 1) % N_NODES].set(1.0)
           .at[idx, (idx - 1) % N_NODES].set(1.0))

    params = init_params(k_p, IN_DIM, HIDDEN_DIM, N_CLASSES)

    fwd = jax.jit(classifier_forward)
    logits = fwd(params, node_feats, adj)
    jax.block_until_ready(logits)
    assert logits.shape == (1, N_CLASSES)

    # Loose sanity check vs. a pure-JAX reference (bf16 MXU operands => not
    # bit-exact; tolerance is generous on purpose).
    ref = _reference_forward(params, node_feats, adj)
    assert bool(jnp.allclose(logits, ref, rtol=0.2, atol=0.1)), (logits, ref)

    print("KERNEL_OK")
</pallas_src>

<mosaic_0001>
module attributes {stable_mosaic.version = 11 : i64} {
  func.func @_fused_classifier_kernel(%arg0: memref<128x192xbf16, #tpu.memory_space<vmem>>, %arg1: memref<8x8xf32, #tpu.memory_space<vmem>>, %arg2: memref<4x192x64xbf16, #tpu.memory_space<vmem>>, %arg3: memref<4x64x64xbf16, #tpu.memory_space<vmem>>, %arg4: memref<8x64xf32, #tpu.memory_space<vmem>>, %arg5: memref<5x64x64xbf16, #tpu.memory_space<vmem>>, %arg6: memref<5x64xf32, #tpu.memory_space<vmem>>, %arg7: memref<3x128x128xbf16, #tpu.memory_space<vmem>>, %arg8: memref<3x128xf32, #tpu.memory_space<vmem>>, %arg9: memref<1x5xf32, #tpu.memory_space<vmem>>, %arg10: memref<64x192xf32, #tpu.memory_space<vmem>>, %arg11: memref<64x192xf32, #tpu.memory_space<vmem>>) attributes {dimension_semantics = [], scalar_prefetch = 0 : i64, scratch_operands = 2 : i64, tpu.core_type = #tpu.core_type<tc>} {
    %c0 = arith.constant 0 : index
    %c0_0 = arith.constant 0 : index
    %0 = vector.load %arg0[%c0, %c0_0] : memref<128x192xbf16, #tpu.memory_space<vmem>>, vector<128x192xbf16>
    %c0_1 = arith.constant 0 : index
    %c0_2 = arith.constant 0 : index
    %c0_3 = arith.constant 0 : index
    %1 = vector.load %arg2[%c0_1, %c0_2, %c0_3] : memref<4x192x64xbf16, #tpu.memory_space<vmem>>, vector<1x192x64xbf16>
    %2 = vector.shape_cast %1 : vector<1x192x64xbf16> to vector<192x64xbf16>
    %cst = arith.constant dense<0.000000e+00> : vector<128x64xf32>
    %3 = tpu.matmul %0, %2, %cst {dimension_numbers = #tpu.dot_dimension_numbers<[1], [0], [0], [1], [0, 0, 1, 1], [], []>} : vector<128x192xbf16>, vector<192x64xbf16>, vector<128x64xf32> -> vector<128x64xf32>
    %c0_4 = arith.constant 0 : index
    %c0_5 = arith.constant 0 : index
    %4 = vector.load %arg4[%c0_4, %c0_5] : memref<8x64xf32, #tpu.memory_space<vmem>>, vector<1x64xf32>
    %5 = vector.broadcast %4 : vector<1x64xf32> to vector<128x64xf32>
    %6 = arith.addf %3, %5 : vector<128x64xf32>
    %cst_6 = arith.constant 0.000000e+00 : f32
    %7 = vector.broadcast %cst_6 : f32 to vector<128x64xf32>
    %8 = arith.maximumf %6, %7 : vector<128x64xf32>
    %9 = vector.extract_strided_slice %8 {offsets = [0, 0], sizes = [8, 64], strides = [1, 1]} : vector<128x64xf32> to vector<8x64xf32>
    %10 = vector.extract_strided_slice %8 {offsets = [8, 0], sizes = [8, 64], strides = [1, 1]} : vector<128x64xf32> to vector<8x64xf32>
    %11 = arith.maximumf %9, %10 : vector<8x64xf32>
    %12 = vector.extract_strided_slice %8 {offsets = [16, 0], sizes = [8, 64], strides = [1, 1]} : vector<128x64xf32> to vector<8x64xf32>
    %13 = vector.extract_strided_slice %8 {offsets = [8, 0], sizes = [8, 64], strides = [1, 1]} : vector<128x64xf32> to vector<8x64xf32>
    %14 = arith.maximumf %12, %13 : vector<8x64xf32>
    %15 = vector.extract_strided_slice %8 {offsets = [24, 0], sizes = [8, 64], strides = [1, 1]} : vector<128x64xf32> to vector<8x64xf32>
    %16 = arith.maximumf %14, %15 : vector<8x64xf32>
    %17 = vector.extract_strided_slice %8 {offsets = [32, 0], sizes = [8, 64], strides = [1, 1]} : vector<128x64xf32> to vector<8x64xf32>
    %18 = vector.extract_strided_slice %8 {offsets = [24, 0], sizes = [8, 64], strides = [1, 1]} : vector<128x64xf32> to vector<8x64xf32>
    %19 = arith.maximumf %17, %18 : vector<8x64xf32>
    %20 = vector.extract_strided_slice %8 {offsets = [40, 0], sizes = [8, 64], strides = [1, 1]} : vector<128x64xf32> to vector<8x64xf32>
    %21 = arith.maximumf %19, %20 : vector<8x64xf32>
    %22 = vector.extract_strided_slice %8 {offsets = [48, 0], sizes = [8, 64], strides = [1, 1]} : vector<128x64xf32> to vector<8x64xf32>
    %23 = vector.extract_strided_slice %8 {offsets = [40, 0], sizes = [8, 64], strides = [1, 1]} : vector<128x64xf32> to vector<8x64xf32>
    %24 = arith.maximumf %22, %23 : vector<8x64xf32>
    %25 = vector.extract_strided_slice %8 {offsets = [56, 0], sizes = [8, 64], strides = [1, 1]} : vector<128x64xf32> to vector<8x64xf32>
    %26 = arith.maximumf %24, %25 : vector<8x64xf32>
    %27 = vector.extract_strided_slice %8 {offsets = [64, 0], sizes = [8, 64], strides = [1, 1]} : vector<128x64xf32> to vector<8x64xf32>
    %28 = vector.extract_strided_slice %8 {offsets = [56, 0], sizes = [8, 64], strides = [1, 1]} : vector<128x64xf32> to vector<8x64xf32>
    %29 = arith.maximumf %27, %28 : vector<8x64xf32>
    %30 = vector.extract_strided_slice %8 {offsets = [72, 0], sizes = [8, 64], strides = [1, 1]} : vector<128x64xf32> to vector<8x64xf32>
    %31 = arith.maximumf %29, %30 : vector<8x64xf32>
    %32 = vector.extract_strided_slice %8 {offsets = [80, 0], sizes = [8, 64], strides = [1, 1]} : vector<128x64xf32> to vector<8x64xf32>
    %33 = vector.extract_strided_slice %8 {offsets = [72, 0], sizes = [8, 64], strides = [1, 1]} : vector<128x64xf32> to vector<8x64xf32>
    %34 = arith.maximumf %32, %33 : vector<8x64xf32>
    %35 = vector.extract_strided_slice %8 {offsets = [88, 0], sizes = [8, 64], strides = [1, 1]} : vector<128x64xf32> to vector<8x64xf32>
    %36 = arith.maximumf %34, %35 : vector<8x64xf32>
    %37 = vector.extract_strided_slice %8 {offsets = [96, 0], sizes = [8, 64], strides = [1, 1]} : vector<128x64xf32> to vector<8x64xf32>
    %38 = vector.extract_strided_slice %8 {offsets = [88, 0], sizes = [8, 64], strides = [1, 1]} : vector<128x64xf32> to vector<8x64xf32>
    %39 = arith.maximumf %37, %38 : vector<8x64xf32>
    %40 = vector.extract_strided_slice %8 {offsets = [104, 0], sizes = [8, 64], strides = [1, 1]} : vector<128x64xf32> to vector<8x64xf32>
    %41 = arith.maximumf %39, %40 : vector<8x64xf32>
    %42 = vector.extract_strided_slice %8 {offsets = [112, 0], sizes = [8, 64], strides = [1, 1]} : vector<128x64xf32> to vector<8x64xf32>
    %43 = vector.extract_strided_slice %8 {offsets = [104, 0], sizes = [8, 64], strides = [1, 1]} : vector<128x64xf32> to vector<8x64xf32>
    %44 = arith.maximumf %42, %43 : vector<8x64xf32>
    %45 = vector.extract_strided_slice %8 {offsets = [120, 0], sizes = [8, 64], strides = [1, 1]} : vector<128x64xf32> to vector<8x64xf32>
    %46 = arith.maximumf %44, %45 : vector<8x64xf32>
    %cst_7 = arith.constant 0.000000e+00 : f32
    %47 = vector.broadcast %cst_7 : f32 to vector<8x64xf32>
    %c0_8 = arith.constant 0 : index
    %c0_9 = arith.constant 0 : index
    %48 = vector.load %arg10[%c0_8, %c0_9] : memref<64x192xf32, #tpu.memory_space<vmem>>, vector<8x64xf32>
    tpu.vector_store %arg10[%c0_8, %c0_9], %47 {strides = array<i32>} : memref<64x192xf32, #tpu.memory_space<vmem>>, vector<8x64xf32>,
    %c56 = arith.constant 56 : index
    %c128 = arith.constant 128 : index
    %49 = vector.load %arg10[%c56, %c128] : memref<64x192xf32, #tpu.memory_space<vmem>>, vector<8x64xf32>
    tpu.vector_store %arg10[%c56, %c128], %47 {strides = array<i32>} : memref<64x192xf32, #tpu.memory_space<vmem>>, vector<8x64xf32>,
    %c0_10 = arith.constant 0 : index
    %c64 = arith.constant 64 : index
    %50 = vector.load %arg10[%c0_10, %c64] : memref<64x192xf32, #tpu.memory_space<vmem>>, vector<8x64xf32>
    tpu.vector_store %arg10[%c0_10, %c64], %11 {strides = array<i32>} : memref<64x192xf32, #tpu.memory_space<vmem>>, vector<8x64xf32>,
    %c8 = arith.constant 8 : index
    %c0_11 = arith.constant 0 : index
    %51 = vector.load %arg10[%c8, %c0_11] : memref<64x192xf32, #tpu.memory_space<vmem>>, vector<8x64xf32>
    tpu.vector_store %arg10[%c8, %c0_11], %11 {strides = array<i32>} : memref<64x192xf32, #tpu.memory_space<vmem>>, vector<8x64xf32>,
    %c8_12 = arith.constant 8 : index
    %c64_13 = arith.constant 64 : index
    %52 = vector.load %arg10[%c8_12, %c64_13] : memref<64x192xf32, #tpu.memory_space<vmem>>, vector<8x64xf32>
    tpu.vector_store %arg10[%c8_12, %c64_13], %16 {strides = array<i32>} : memref<64x192xf32, #tpu.memory_space<vmem>>, vector<8x64xf32>,
    %c16 = arith.constant 16 : index
    %c0_14 = arith.constant 0 : index
    %53 = vector.load %arg10[%c16, %c0_14] : memref<64x192xf32, #tpu.memory_space<vmem>>, vector<8x64xf32>
    tpu.vector_store %arg10[%c16, %c0_14], %16 {strides = array<i32>} : memref<64x192xf32, #tpu.memory_space<vmem>>, vector<8x64xf32>,
    %c0_15 = arith.constant 0 : index
    %c128_16 = arith.constant 128 : index
    %54 = vector.load %arg10[%c0_15, %c128_16] : memref<64x192xf32, #tpu.memory_space<vmem>>, vector<8x64xf32>
    tpu.vector_store %arg10[%c0_15, %c128_16], %16 {strides = array<i32>} : memref<64x192xf32, #tpu.memory_space<vmem>>, vector<8x64xf32>,
    %c16_17 = arith.constant 16 : index
    %c64_18 = arith.constant 64 : index
    %55 = vector.load %arg10[%c16_17, %c64_18] : memref<64x192xf32, #tpu.memory_space<vmem>>, vector<8x64xf32>
    tpu.vector_store %arg10[%c16_17, %c64_18], %21 {strides = array<i32>} : memref<64x192xf32, #tpu.memory_space<vmem>>, vector<8x64xf32>,
    %c24 = arith.constant 24 : index
    %c0_19 = arith.constant 0 : index
    %56 = vector.load %arg10[%c24, %c0_19] : memref<64x192xf32, #tpu.memory_space<vmem>>, vector<8x64xf32>
    tpu.vector_store %arg10[%c24, %c0_19], %21 {strides = array<i32>} : memref<64x192xf32, #tpu.memory_space<vmem>>, vector<8x64xf32>,
    %c8_20 = arith.constant 8 : index
    %c128_21 = arith.constant 128 : index
    %57 = vector.load %arg10[%c8_20, %c128_21] : memref<64x192xf32, #tpu.memory_space<vmem>>, vector<8x64xf32>
    tpu.vector_store %arg10[%c8_20, %c128_21], %21 {strides = array<i32>} : memref<64x192xf32, #tpu.memory_space<vmem>>, vector<8x64xf32>,
    %c24_22 = arith.constant 24 : index
    %c64_23 = arith.constant 64 : index
    %58 = vector.load %arg10[%c24_22, %c64_23] : memref<64x192xf32, #tpu.memory_space<vmem>>, vector<8x64xf32>
    tpu.vector_store %arg10[%c24_22, %c64_23], %26 {strides = array<i32>} : memref<64x192xf32, #tpu.memory_space<vmem>>, vector<8x64xf32>,
    %c32 = arith.constant 32 : index
    %c0_24 = arith.constant 0 : index
    %59 = vector.load %arg10[%c32, %c0_24] : memref<64x192xf32, #tpu.memory_space<vmem>>, vector<8x64xf32>
    tpu.vector_store %arg10[%c32, %c0_24], %26 {strides = array<i32>} : memref<64x192xf32, #tpu.memory_space<vmem>>, vector<8x64xf32>,
    %c16_25 = arith.constant 16 : index
    %c128_26 = arith.constant 128 : index
    %60 = vector.load %arg10[%c16_25, %c128_26] : memref<64x192xf32, #tpu.memory_space<vmem>>, vector<8x64xf32>
    tpu.vector_store %arg10[%c16_25, %c128_26], %26 {strides = array<i32>} : memref<64x192xf32, #tpu.memory_space<vmem>>, vector<8x64xf32>,
    %c32_27 = arith.constant 32 : index
    %c64_28 = arith.constant 64 : index
    %61 = vector.load %arg10[%c32_27, %c64_28] : memref<64x192xf32, #tpu.memory_space<vmem>>, vector<8x64xf32>
    tpu.vector_store %arg10[%c32_27, %c64_28], %31 {strides = array<i32>} : memref<64x192xf32, #tpu.memory_space<vmem>>, vector<8x64xf32>,
    %c40 = arith.constant 40 : index
    %c0_29 = arith.constant 0 : index
    %62 = vector.load %arg10[%c40, %c0_29] : memref<64x192xf32, #tpu.memory_space<vmem>>, vector<8x64xf32>
    tpu.vector_store %arg10[%c40, %c0_29], %31 {strides = array<i32>} : memref<64x192xf32, #tpu.memory_space<vmem>>, vector<8x64xf32>,
    %c24_30 = arith.constant 24 : index
    %c128_31 = arith.constant 128 : index
    %63 = vector.load %arg10[%c24_30, %c128_31] : memref<64x192xf32, #tpu.memory_space<vmem>>, vector<8x64xf32>
    tpu.vector_store %arg10[%c24_30, %c128_31], %31 {strides = array<i32>} : memref<64x192xf32, #tpu.memory_space<vmem>>, vector<8x64xf32>,
    %c40_32 = arith.constant 40 : index
    %c64_33 = arith.constant 64 : index
    %64 = vector.load %arg10[%c40_32, %c64_33] : memref<64x192xf32, #tpu.memory_space<vmem>>, vector<8x64xf32>
    tpu.vector_store %arg10[%c40_32, %c64_33], %36 {strides = array<i32>} : memref<64x192xf32, #tpu.memory_space<vmem>>, vector<8x64xf32>,
    %c48 = arith.constant 48 : index
    %c0_34 = arith.constant 0 : index
    %65 = vector.load %arg10[%c48, %c0_34] : memref<64x192xf32, #tpu.memory_space<vmem>>, vector<8x64xf32>
    tpu.vector_store %arg10[%c48, %c0_34], %36 {strides = array<i32>} : memref<64x192xf32, #tpu.memory_space<vmem>>, vector<8x64xf32>,
    %c32_35 = arith.constant 32 : index
    %c128_36 = arith.constant 128 : index
    %66 = vector.load %arg10[%c32_35, %c128_36] : memref<64x192xf32, #tpu.memory_space<vmem>>, vector<8x64xf32>
    tpu.vector_store %arg10[%c32_35, %c128_36], %36 {strides = array<i32>} : memref<64x192xf32, #tpu.memory_space<vmem>>, vector<8x64xf32>,
    %c48_37 = arith.constant 48 : index
    %c64_38 = arith.constant 64 : index
    %67 = vector.load %arg10[%c48_37, %c64_38] : memref<64x192xf32, #tpu.memory_space<vmem>>, vector<8x64xf32>
    tpu.vector_store %arg10[%c48_37, %c64_38], %41 {strides = array<i32>} : memref<64x192xf32, #tpu.memory_space<vmem>>, vector<8x64xf32>,
    %c56_39 = arith.constant 56 : index
    %c0_40 = arith.constant 0 : index
    %68 = vector.load %arg10[%c56_39, %c0_40] : memref<64x192xf32, #tpu.memory_space<vmem>>, vector<8x64xf32>
    tpu.vector_store %arg10[%c56_39, %c0_40], %41 {strides = array<i32>} : memref<64x192xf32, #tpu.memory_space<vmem>>, vector<8x64xf32>,
    %c40_41 = arith.constant 40 : index
    %c128_42 = arith.constant 128 : index
    %69 = vector.load %arg10[%c40_41, %c128_42] : memref<64x192xf32, #tpu.memory_space<vmem>>, vector<8x64xf32>
    tpu.vector_store %arg10[%c40_41, %c128_42], %41 {strides = array<i32>} : memref<64x192xf32, #tpu.memory_space<vmem>>, vector<8x64xf32>,
    %c56_43 = arith.constant 56 : index
    %c64_44 = arith.constant 64 : index
    %70 = vector.load %arg10[%c56_43, %c64_44] : memref<64x192xf32, #tpu.memory_space<vmem>>, vector<8x64xf32>
    tpu.vector_store %arg10[%c56_43, %c64_44], %46 {strides = array<i32>} : memref<64x192xf32, #tpu.memory_space<vmem>>, vector<8x64xf32>,
    %c48_45 = arith.constant 48 : index
    %c128_46 = arith.constant 128 : index
    %71 = vector.load %arg10[%c48_45, %c128_46] : memref<64x192xf32, #tpu.memory_space<vmem>>, vector<8x64xf32>
    tpu.vector_store %arg10[%c48_45, %c128_46], %46 {strides = array<i32>} : memref<64x192xf32, #tpu.memory_space<vmem>>, vector<8x64xf32>,
    %c0_47 = arith.constant 0 : index
    %c0_48 = arith.constant 0 : index
    %72 = vector.load %arg10[%c0_47, %c0_48] : memref<64x192xf32, #tpu.memory_space<vmem>>, vector<64x192xf32>
    %73 = arith.truncf %72 : vector<64x192xf32> to vector<64x192xbf16>
    %c1 = arith.constant 1 : index
    %c0_49 = arith.constant 0 : index
    %c0_50 = arith.constant 0 : index
    %74 = vector.load %arg2[%c1, %c0_49, %c0_50] : memref<4x192x64xbf16, #tpu.memory_space<vmem>>, vector<1x192x64xbf16>
    %75 = vector.shape_cast %74 : vector<1x192x64xbf16> to vector<192x64xbf16>
    %cst_51 = arith.constant dense<0.000000e+00> : vector<64x64xf32>
    %76 = tpu.matmul %73, %75, %cst_51 {dimension_numbers = #tpu.dot_dimension_numbers<[1], [0], [0], [1], [0, 0, 1, 1], [], []>} : vector<64x192xbf16>, vector<192x64xbf16>, vector<64x64xf32> -> vector<64x64xf32>
    %c1_52 = arith.constant 1 : index
    %c0_53 = arith.constant 0 : index
    %77 = vector.load %arg4[%c1_52, %c0_53] : memref<8x64xf32, #tpu.memory_space<vmem>>, vector<1x64xf32>
    %78 = vector.broadcast %77 : vector<1x64xf32> to vector<64x64xf32>
    %79 = arith.addf %76, %78 : vector<64x64xf32>
    %cst_54 = arith.constant 0.000000e+00 : f32
    %80 = vector.broadcast %cst_54 : f32 to vector<64x64xf32>
    %81 = arith.maximumf %79, %80 : vector<64x64xf32>
    %82 = vector.extract_strided_slice %81 {offsets = [0, 0], sizes = [8, 64], strides = [1, 1]} : vector<64x64xf32> to vector<8x64xf32>
    %83 = vector.extract_strided_slice %81 {offsets = [8, 0], sizes = [8, 64], strides = [1, 1]} : vector<64x64xf32> to vector<8x64xf32>
    %84 = arith.maximumf %82, %83 : vector<8x64xf32>
    %85 = vector.extract_strided_slice %81 {offsets = [16, 0], sizes = [8, 64], strides = [1, 1]} : vector<64x64xf32> to vector<8x64xf32>
    %86 = vector.extract_strided_slice %81 {offsets = [8, 0], sizes = [8, 64], strides = [1, 1]} : vector<64x64xf32> to vector<8x64xf32>
    %87 = arith.maximumf %85, %86 : vector<8x64xf32>
    %88 = vector.extract_strided_slice %81 {offsets = [24, 0], sizes = [8, 64], strides = [1, 1]} : vector<64x64xf32> to vector<8x64xf32>
    %89 = arith.maximumf %87, %88 : vector<8x64xf32>
    %90 = vector.extract_strided_slice %81 {offsets = [32, 0], sizes = [8, 64], strides = [1, 1]} : vector<64x64xf32> to vector<8x64xf32>
    %91 = vector.extract_strided_slice %81 {offsets = [24, 0], sizes = [8, 64], strides = [1, 1]} : vector<64x64xf32> to vector<8x64xf32>
    %92 = arith.maximumf %90, %91 : vector<8x64xf32>
    %93 = vector.extract_strided_slice %81 {offsets = [40, 0], sizes = [8, 64], strides = [1, 1]} : vector<64x64xf32> to vector<8x64xf32>
    %94 = arith.maximumf %92, %93 : vector<8x64xf32>
    %95 = vector.extract_strided_slice %81 {offsets = [48, 0], sizes = [8, 64], strides = [1, 1]} : vector<64x64xf32> to vector<8x64xf32>
    %96 = vector.extract_strided_slice %81 {offsets = [40, 0], sizes = [8, 64], strides = [1, 1]} : vector<64x64xf32> to vector<8x64xf32>
    %97 = arith.maximumf %95, %96 : vector<8x64xf32>
    %98 = vector.extract_strided_slice %81 {offsets = [56, 0], sizes = [8, 64], strides = [1, 1]} : vector<64x64xf32> to vector<8x64xf32>
    %99 = arith.maximumf %97, %98 : vector<8x64xf32>
    %cst_55 = arith.constant 0.000000e+00 : f32
    %100 = vector.broadcast %cst_55 : f32 to vector<8x64xf32>
    %c0_56 = arith.constant 0 : index
    %c0_57 = arith.constant 0 : index
    %101 = vector.load %arg11[%c0_56, %c0_57] : memref<64x192xf32, #tpu.memory_space<vmem>>, vector<8x64xf32>
    tpu.vector_store %arg11[%c0_56, %c0_57], %100 {strides = array<i32>} : memref<64x192xf32, #tpu.memory_space<vmem>>, vector<8x64xf32>,
    %c24_58 = arith.constant 24 : index
    %c128_59 = arith.constant 128 : index
    %102 = vector.load %arg11[%c24_58, %c128_59] : memref<64x192xf32, #tpu.memory_space<vmem>>, vector<8x64xf32>
    tpu.vector_store %arg11[%c24_58, %c128_59], %100 {strides = array<i32>} : memref<64x192xf32, #tpu.memory_space<vmem>>, vector<8x64xf32>,
    %c0_60 = arith.constant 0 : index
    %c64_61 = arith.constant 64 : index
    %103 = vector.load %arg11[%c0_60, %c64_61] : memref<64x192xf32, #tpu.memory_space<vmem>>, vector<8x64xf32>
    tpu.vector_store %arg11[%c0_60, %c64_61], %84 {strides = array<i32>} : memref<64x192xf32, #tpu.memory_space<vmem>>, vector<8x64xf32>,
    %c8_62 = arith.constant 8 : index
    %c0_63 = arith.constant 0 : index
    %104 = vector.load %arg11[%c8_62, %c0_63] : memref<64x192xf32, #tpu.memory_space<vmem>>, vector<8x64xf32>
    tpu.vector_store %arg11[%c8_62, %c0_63], %84 {strides = array<i32>} : memref<64x192xf32, #tpu.memory_space<vmem>>, vector<8x64xf32>,
    %c8_64 = arith.constant 8 : index
    %c64_65 = arith.constant 64 : index
    %105 = vector.load %arg11[%c8_64, %c64_65] : memref<64x192xf32, #tpu.memory_space<vmem>>, vector<8x64xf32>
    tpu.vector_store %arg11[%c8_64, %c64_65], %89 {strides = array<i32>} : memref<64x192xf32, #tpu.memory_space<vmem>>, vector<8x64xf32>,
    %c16_66 = arith.constant 16 : index
    %c0_67 = arith.constant 0 : index
    %106 = vector.load %arg11[%c16_66, %c0_67] : memref<64x192xf32, #tpu.memory_space<vmem>>, vector<8x64xf32>
    tpu.vector_store %arg11[%c16_66, %c0_67], %89 {strides = array<i32>} : memref<64x192xf32, #tpu.memory_space<vmem>>, vector<8x64xf32>,
    %c0_68 = arith.constant 0 : index
    %c128_69 = arith.constant 128 : index
    %107 = vector.load %arg11[%c0_68, %c128_69] : memref<64x192xf32, #tpu.memory_space<vmem>>, vector<8x64xf32>
    tpu.vector_store %arg11[%c0_68, %c128_69], %89 {strides = array<i32>} : memref<64x192xf32, #tpu.memory_space<vmem>>, vector<8x64xf32>,
    %c16_70 = arith.constant 16 : index
    %c64_71 = arith.constant 64 : index
    %108 = vector.load %arg11[%c16_70, %c64_71] : memref<64x192xf32, #tpu.memory_space<vmem>>, vector<8x64xf32>
    tpu.vector_store %arg11[%c16_70, %c64_71], %94 {strides = array<i32>} : memref<64x192xf32, #tpu.memory_space<vmem>>, vector<8x64xf32>,
    %c24_72 = arith.constant 24 : index
    %c0_73 = arith.constant 0 : index
    %109 = vector.load %arg11[%c24_72, %c0_73] : memref<64x192xf32, #tpu.memory_space<vmem>>, vector<8x64xf32>
    tpu.vector_store %arg11[%c24_72, %c0_73], %94 {strides = array<i32>} : memref<64x192xf32, #tpu.memory_space<vmem>>, vector<8x64xf32>,
    %c8_74 = arith.constant 8 : index
    %c128_75 = arith.constant 128 : index
    %110 = vector.load %arg11[%c8_74, %c128_75] : memref<64x192xf32, #tpu.memory_space<vmem>>, vector<8x64xf32>
    tpu.vector_store %arg11[%c8_74, %c128_75], %94 {strides = array<i32>} : memref<64x192xf32, #tpu.memory_space<vmem>>, vector<8x64xf32>,
    %c24_76 = arith.constant 24 : index
    %c64_77 = arith.constant 64 : index
    %111 = vector.load %arg11[%c24_76, %c64_77] : memref<64x192xf32, #tpu.memory_space<vmem>>, vector<8x64xf32>
    tpu.vector_store %arg11[%c24_76, %c64_77], %99 {strides = array<i32>} : memref<64x192xf32, #tpu.memory_space<vmem>>, vector<8x64xf32>,
    %c16_78 = arith.constant 16 : index
    %c128_79 = arith.constant 128 : index
    %112 = vector.load %arg11[%c16_78, %c128_79] : memref<64x192xf32, #tpu.memory_space<vmem>>, vector<8x64xf32>
    tpu.vector_store %arg11[%c16_78, %c128_79], %99 {strides = array<i32>} : memref<64x192xf32, #tpu.memory_space<vmem>>, vector<8x64xf32>,
    %c0_80 = arith.constant 0 : index
    %c0_81 = arith.constant 0 : index
    %113 = vector.load %arg11[%c0_80, %c0_81] : memref<64x192xf32, #tpu.memory_space<vmem>>, vector<32x192xf32>
    %114 = arith.truncf %113 : vector<32x192xf32> to vector<32x192xbf16>
    %c2 = arith.constant 2 : index
    %c0_82 = arith.constant 0 : index
    %c0_83 = arith.constant 0 : index
    %115 = vector.load %arg2[%c2, %c0_82, %c0_83] : memref<4x192x64xbf16, #tpu.memory_space<vmem>>, vector<1x192x64xbf16>
    %116 = vector.shape_cast %115 : vector<1x192x64xbf16> to vector<192x64xbf16>
    %cst_84 = arith.constant dense<0.000000e+00> : vector<32x64xf32>
    %117 = tpu.matmul %114, %116, %cst_84 {dimension_numbers = #tpu.dot_dimension_numbers<[1], [0], [0], [1], [0, 0, 1, 1], [], []>} : vector<32x192xbf16>, vector<192x64xbf16>, vector<32x64xf32> -> vector<32x64xf32>
    %c2_85 = arith.constant 2 : index
    %c0_86 = arith.constant 0 : index
    %118 = vector.load %arg4[%c2_85, %c0_86] : memref<8x64xf32, #tpu.memory_space<vmem>>, vector<1x64xf32>
    %119 = vector.broadcast %118 : vector<1x64xf32> to vector<32x64xf32>
    %120 = arith.addf %117, %119 : vector<32x64xf32>
    %cst_87 = arith.constant 0.000000e+00 : f32
    %121 = vector.broadcast %cst_87 : f32 to vector<32x64xf32>
    %122 = arith.maximumf %120, %121 : vector<32x64xf32>
    %123 = vector.extract_strided_slice %122 {offsets = [0, 0], sizes = [8, 64], strides = [1, 1]} : vector<32x64xf32> to vector<8x64xf32>
    %124 = vector.extract_strided_slice %122 {offsets = [8, 0], sizes = [8, 64], strides = [1, 1]} : vector<32x64xf32> to vector<8x64xf32>
    %125 = arith.maximumf %123, %124 : vector<8x64xf32>
    %126 = vector.extract_strided_slice %122 {offsets = [16, 0], sizes = [8, 64], strides = [1, 1]} : vector<32x64xf32> to vector<8x64xf32>
    %127 = vector.extract_strided_slice %122 {offsets = [8, 0], sizes = [8, 64], strides = [1, 1]} : vector<32x64xf32> to vector<8x64xf32>
    %128 = arith.maximumf %126, %127 : vector<8x64xf32>
    %129 = vector.extract_strided_slice %122 {offsets = [24, 0], sizes = [8, 64], strides = [1, 1]} : vector<32x64xf32> to vector<8x64xf32>
    %130 = arith.maximumf %128, %129 : vector<8x64xf32>
    %cst_88 = arith.constant 0.000000e+00 : f32
    %131 = vector.broadcast %cst_88 : f32 to vector<8x64xf32>
    %c0_89 = arith.constant 0 : index
    %c0_90 = arith.constant 0 : index
    %132 = vector.load %arg10[%c0_89, %c0_90] : memref<64x192xf32, #tpu.memory_space<vmem>>, vector<8x64xf32>
    tpu.vector_store %arg10[%c0_89, %c0_90], %131 {strides = array<i32>} : memref<64x192xf32, #tpu.memory_space<vmem>>, vector<8x64xf32>,
    %c8_91 = arith.constant 8 : index
    %c128_92 = arith.constant 128 : index
    %133 = vector.load %arg10[%c8_91, %c128_92] : memref<64x192xf32, #tpu.memory_space<vmem>>, vector<8x64xf32>
    tpu.vector_store %arg10[%c8_91, %c128_92], %131 {strides = array<i32>} : memref<64x192xf32, #tpu.memory_space<vmem>>, vector<8x64xf32>,
    %c0_93 = arith.constant 0 : index
    %c64_94 = arith.constant 64 : index
    %134 = vector.load %arg10[%c0_93, %c64_94] : memref<64x192xf32, #tpu.memory_space<vmem>>, vector<8x64xf32>
    tpu.vector_store %arg10[%c0_93, %c64_94], %125 {strides = array<i32>} : memref<64x192xf32, #tpu.memory_space<vmem>>, vector<8x64xf32>,
    %c8_95 = arith.constant 8 : index
    %c0_96 = arith.constant 0 : index
    %135 = vector.load %arg10[%c8_95, %c0_96] : memref<64x192xf32, #tpu.memory_space<vmem>>, vector<8x64xf32>
    tpu.vector_store %arg10[%c8_95, %c0_96], %125 {strides = array<i32>} : memref<64x192xf32, #tpu.memory_space<vmem>>, vector<8x64xf32>,
    %c8_97 = arith.constant 8 : index
    %c64_98 = arith.constant 64 : index
    %136 = vector.load %arg10[%c8_97, %c64_98] : memref<64x192xf32, #tpu.memory_space<vmem>>, vector<8x64xf32>
    tpu.vector_store %arg10[%c8_97, %c64_98], %130 {strides = array<i32>} : memref<64x192xf32, #tpu.memory_space<vmem>>, vector<8x64xf32>,
    %c0_99 = arith.constant 0 : index
    %c128_100 = arith.constant 128 : index
    %137 = vector.load %arg10[%c0_99, %c128_100] : memref<64x192xf32, #tpu.memory_space<vmem>>, vector<8x64xf32>
    tpu.vector_store %arg10[%c0_99, %c128_100], %130 {strides = array<i32>} : memref<64x192xf32, #tpu.memory_space<vmem>>, vector<8x64xf32>,
    %c0_101 = arith.constant 0 : index
    %c0_102 = arith.constant 0 : index
    %138 = vector.load %arg10[%c0_101, %c0_102] : memref<64x192xf32, #tpu.memory_space<vmem>>, vector<16x192xf32>
    %139 = arith.truncf %138 : vector<16x192xf32> to vector<16x192xbf16>
    %c3 = arith.constant 3 : index
    %c0_103 = arith.constant 0 : index
    %c0_104 = arith.constant 0 : index
    %140 = vector.load %arg2[%c3, %c0_103, %c0_104] : memref<4x192x64xbf16, #tpu.memory_space<vmem>>, vector<1x192x64xbf16>
    %141 = vector.shape_cast %140 : vector<1x192x64xbf16> to vector<192x64xbf16>
    %cst_105 = arith.constant dense<0.000000e+00> : vector<16x64xf32>
    %142 = tpu.matmul %139, %141, %cst_105 {dimension_numbers = #tpu.dot_dimension_numbers<[1], [0], [0], [1], [0, 0, 1, 1], [], []>} : vector<16x192xbf16>, vector<192x64xbf16>, vector<16x64xf32> -> vector<16x64xf32>
    %c3_106 = arith.constant 3 : index
    %c0_107 = arith.constant 0 : index
    %143 = vector.load %arg4[%c3_106, %c0_107] : memref<8x64xf32, #tpu.memory_space<vmem>>, vector<1x64xf32>
    %144 = vector.broadcast %143 : vector<1x64xf32> to vector<16x64xf32>
    %145 = arith.addf %142, %144 : vector<16x64xf32>
    %cst_108 = arith.constant 0.000000e+00 : f32
    %146 = vector.broadcast %cst_108 : f32 to vector<16x64xf32>
    %147 = arith.maximumf %145, %146 : vector<16x64xf32>
    %148 = vector.extract_strided_slice %147 {offsets = [0, 0], sizes = [8, 64], strides = [1, 1]} : vector<16x64xf32> to vector<8x64xf32>
    %149 = vector.extract_strided_slice %147 {offsets = [8, 0], sizes = [8, 64], strides = [1, 1]} : vector<16x64xf32> to vector<8x64xf32>
    %150 = arith.maximumf %148, %149 : vector<8x64xf32>
    %151 = arith.truncf %150 : vector<8x64xf32> to vector<8x64xbf16>
    %c0_109 = arith.constant 0 : index
    %c0_110 = arith.constant 0 : index
    %c0_111 = arith.constant 0 : index
    %152 = vector.load %arg3[%c0_109, %c0_110, %c0_111] : memref<4x64x64xbf16, #tpu.memory_space<vmem>>, vector<1x64x64xbf16>
    %153 = vector.shape_cast %152 : vector<1x64x64xbf16> to vector<64x64xbf16>
    %cst_112 = arith.constant dense<0.000000e+00> : vector<8x64xf32>
    %154 = tpu.matmul %151, %153, %cst_112 {dimension_numbers = #tpu.dot_dimension_numbers<[1], [0], [0], [1], [0, 0, 1, 1], [], []>} : vector<8x64xbf16>, vector<64x64xbf16>, vector<8x64xf32> -> vector<8x64xf32>
    %c4 = arith.constant 4 : index
    %c0_113 = arith.constant 0 : index
    %155 = vector.load %arg4[%c4, %c0_113] : memref<8x64xf32, #tpu.memory_space<vmem>>, vector<1x64xf32>
    %156 = vector.broadcast %155 : vector<1x64xf32> to vector<8x64xf32>
    %157 = arith.addf %154, %156 : vector<8x64xf32>
    %cst_114 = arith.constant 0.000000e+00 : f32
    %158 = vector.broadcast %cst_114 : f32 to vector<8x64xf32>
    %159 = arith.maximumf %157, %158 : vector<8x64xf32>
    %160 = arith.truncf %159 : vector<8x64xf32> to vector<8x64xbf16>
    %c1_115 = arith.constant 1 : index
    %c0_116 = arith.constant 0 : index
    %c0_117 = arith.constant 0 : index
    %161 = vector.load %arg3[%c1_115, %c0_116, %c0_117] : memref<4x64x64xbf16, #tpu.memory_space<vmem>>, vector<1x64x64xbf16>
    %162 = vector.shape_cast %161 : vector<1x64x64xbf16> to vector<64x64xbf16>
    %cst_118 = arith.constant dense<0.000000e+00> : vector<8x64xf32>
    %163 = tpu.matmul %160, %162, %cst_118 {dimension_numbers = #tpu.dot_dimension_numbers<[1], [0], [0], [1], [0, 0, 1, 1], [], []>} : vector<8x64xbf16>, vector<64x64xbf16>, vector<8x64xf32> -> vector<8x64xf32>
    %c5 = arith.constant 5 : index
    %c0_119 = arith.constant 0 : index
    %164 = vector.load %arg4[%c5, %c0_119] : memref<8x64xf32, #tpu.memory_space<vmem>>, vector<1x64xf32>
    %165 = vector.broadcast %164 : vector<1x64xf32> to vector<8x64xf32>
    %166 = arith.addf %163, %165 : vector<8x64xf32>
    %cst_120 = arith.constant 0.000000e+00 : f32
    %167 = vector.broadcast %cst_120 : f32 to vector<8x64xf32>
    %168 = arith.maximumf %166, %167 : vector<8x64xf32>
    %169 = arith.truncf %168 : vector<8x64xf32> to vector<8x64xbf16>
    %c2_121 = arith.constant 2 : index
    %c0_122 = arith.constant 0 : index
    %c0_123 = arith.constant 0 : index
    %170 = vector.load %arg3[%c2_121, %c0_122, %c0_123] : memref<4x64x64xbf16, #tpu.memory_space<vmem>>, vector<1x64x64xbf16>
    %171 = vector.shape_cast %170 : vector<1x64x64xbf16> to vector<64x64xbf16>
    %cst_124 = arith.constant dense<0.000000e+00> : vector<8x64xf32>
    %172 = tpu.matmul %169, %171, %cst_124 {dimension_numbers = #tpu.dot_dimension_numbers<[1], [0], [0], [1], [0, 0, 1, 1], [], []>} : vector<8x64xbf16>, vector<64x64xbf16>, vector<8x64xf32> -> vector<8x64xf32>
    %c6 = arith.constant 6 : index
    %c0_125 = arith.constant 0 : index
    %173 = vector.load %arg4[%c6, %c0_125] : memref<8x64xf32, #tpu.memory_space<vmem>>, vector<1x64xf32>
    %174 = vector.broadcast %173 : vector<1x64xf32> to vector<8x64xf32>
    %175 = arith.addf %172, %174 : vector<8x64xf32>
    %cst_126 = arith.constant 0.000000e+00 : f32
    %176 = vector.broadcast %cst_126 : f32 to vector<8x64xf32>
    %177 = arith.maximumf %175, %176 : vector<8x64xf32>
    %178 = arith.truncf %177 : vector<8x64xf32> to vector<8x64xbf16>
    %c3_127 = arith.constant 3 : index
    %c0_128 = arith.constant 0 : index
    %c0_129 = arith.constant 0 : index
    %179 = vector.load %arg3[%c3_127, %c0_128, %c0_129] : memref<4x64x64xbf16, #tpu.memory_space<vmem>>, vector<1x64x64xbf16>
    %180 = vector.shape_cast %179 : vector<1x64x64xbf16> to vector<64x64xbf16>
    %cst_130 = arith.constant dense<0.000000e+00> : vector<8x64xf32>
    %181 = tpu.matmul %178, %180, %cst_130 {dimension_numbers = #tpu.dot_dimension_numbers<[1], [0], [0], [1], [0, 0, 1, 1], [], []>} : vector<8x64xbf16>, vector<64x64xbf16>, vector<8x64xf32> -> vector<8x64xf32>
    %c7 = arith.constant 7 : index
    %c0_131 = arith.constant 0 : index
    %182 = vector.load %arg4[%c7, %c0_131] : memref<8x64xf32, #tpu.memory_space<vmem>>, vector<1x64xf32>
    %183 = vector.broadcast %182 : vector<1x64xf32> to vector<8x64xf32>
    %184 = arith.addf %181, %183 : vector<8x64xf32>
    %cst_132 = arith.constant 0.000000e+00 : f32
    %185 = vector.broadcast %cst_132 : f32 to vector<8x64xf32>
    %186 = arith.maximumf %184, %185 : vector<8x64xf32>
    %187 = arith.truncf %186 : vector<8x64xf32> to vector<8x64xbf16>
    %c0_133 = arith.constant 0 : index
    %c0_134 = arith.constant 0 : index
    %188 = vector.load %arg1[%c0_133, %c0_134] : memref<8x8xf32, #tpu.memory_space<vmem>>, vector<8x8xf32>
    %189 = arith.truncf %188 : vector<8x8xf32> to vector<8x8xbf16>
    %cst_135 = arith.constant dense<0.000000e+00> : vector<8x64xf32>
    %190 = tpu.matmul %189, %187, %cst_135 {dimension_numbers = #tpu.dot_dimension_numbers<[1], [0], [0], [1], [0, 0, 1, 1], [], []>} : vector<8x8xbf16>, vector<8x64xbf16>, vector<8x64xf32> -> vector<8x64xf32>
    %191 = arith.truncf %190 : vector<8x64xf32> to vector<8x64xbf16>
    %c0_136 = arith.constant 0 : index
    %c0_137 = arith.constant 0 : index
    %c0_138 = arith.constant 0 : index
    %192 = vector.load %arg5[%c0_136, %c0_137, %c0_138] : memref<5x64x64xbf16, #tpu.memory_space<vmem>>, vector<1x64x64xbf16>
    %193 = vector.shape_cast %192 : vector<1x64x64xbf16> to vector<64x64xbf16>
    %cst_139 = arith.constant dense<0.000000e+00> : vector<8x64xf32>
    %194 = tpu.matmul %191, %193, %cst_139 {dimension_numbers = #tpu.dot_dimension_numbers<[1], [0], [0], [1], [0, 0, 1, 1], [], []>} : vector<8x64xbf16>, vector<64x64xbf16>, vector<8x64xf32> -> vector<8x64xf32>
    %c0_140 = arith.constant 0 : index
    %c0_141 = arith.constant 0 : index
    %195 = vector.load %arg6[%c0_140, %c0_141] : memref<5x64xf32, #tpu.memory_space<vmem>>, vector<1x64xf32>
    %196 = vector.broadcast %195 : vector<1x64xf32> to vector<8x64xf32>
    %197 = arith.addf %194, %196 : vector<8x64xf32>
    %198 = arith.truncf %197 : vector<8x64xf32> to vector<8x64xbf16>
    %cst_142 = arith.constant dense<0.000000e+00> : vector<8x64xf32>
    %199 = tpu.matmul %189, %198, %cst_142 {dimension_numbers = #tpu.dot_dimension_numbers<[1], [0], [0], [1], [0, 0, 1, 1], [], []>} : vector<8x8xbf16>, vector<8x64xbf16>, vector<8x64xf32> -> vector<8x64xf32>
    %200 = arith.truncf %199 : vector<8x64xf32> to vector<8x64xbf16>
    %c1_143 = arith.constant 1 : index
    %c0_144 = arith.constant 0 : index
    %c0_145 = arith.constant 0 : index
    %201 = vector.load %arg5[%c1_143, %c0_144, %c0_145] : memref<5x64x64xbf16, #tpu.memory_space<vmem>>, vector<1x64x64xbf16>
    %202 = vector.shape_cast %201 : vector<1x64x64xbf16> to vector<64x64xbf16>
    %cst_146 = arith.constant dense<0.000000e+00> : vector<8x64xf32>
    %203 = tpu.matmul %200, %202, %cst_146 {dimension_numbers = #tpu.dot_dimension_numbers<[1], [0], [0], [1], [0, 0, 1, 1], [], []>} : vector<8x64xbf16>, vector<64x64xbf16>, vector<8x64xf32> -> vector<8x64xf32>
    %c1_147 = arith.constant 1 : index
    %c0_148 = arith.constant 0 : index
    %204 = vector.load %arg6[%c1_147, %c0_148] : memref<5x64xf32, #tpu.memory_space<vmem>>, vector<1x64xf32>
    %205 = vector.broadcast %204 : vector<1x64xf32> to vector<8x64xf32>
    %206 = arith.addf %203, %205 : vector<8x64xf32>
    %207 = arith.truncf %206 : vector<8x64xf32> to vector<8x64xbf16>
    %cst_149 = arith.constant dense<0.000000e+00> : vector<8x64xf32>
    %208 = tpu.matmul %189, %207, %cst_149 {dimension_numbers = #tpu.dot_dimension_numbers<[1], [0], [0], [1], [0, 0, 1, 1], [], []>} : vector<8x8xbf16>, vector<8x64xbf16>, vector<8x64xf32> -> vector<8x64xf32>
    %209 = arith.truncf %208 : vector<8x64xf32> to vector<8x64xbf16>
    %c2_150 = arith.constant 2 : index
    %c0_151 = arith.constant 0 : index
    %c0_152 = arith.constant 0 : index
    %210 = vector.load %arg5[%c2_150, %c0_151, %c0_152] : memref<5x64x64xbf16, #tpu.memory_space<vmem>>, vector<1x64x64xbf16>
    %211 = vector.shape_cast %210 : vector<1x64x64xbf16> to vector<64x64xbf16>
    %cst_153 = arith.constant dense<0.000000e+00> : vector<8x64xf32>
    %212 = tpu.matmul %209, %211, %cst_153 {dimension_numbers = #tpu.dot_dimension_numbers<[1], [0], [0], [1], [0, 0, 1, 1], [], []>} : vector<8x64xbf16>, vector<64x64xbf16>, vector<8x64xf32> -> vector<8x64xf32>
    %c2_154 = arith.constant 2 : index
    %c0_155 = arith.constant 0 : index
    %213 = vector.load %arg6[%c2_154, %c0_155] : memref<5x64xf32, #tpu.memory_space<vmem>>, vector<1x64xf32>
    %214 = vector.broadcast %213 : vector<1x64xf32> to vector<8x64xf32>
    %215 = arith.addf %212, %214 : vector<8x64xf32>
    %216 = arith.truncf %215 : vector<8x64xf32> to vector<8x64xbf16>
    %cst_156 = arith.constant dense<0.000000e+00> : vector<8x64xf32>
    %217 = tpu.matmul %189, %216, %cst_156 {dimension_numbers = #tpu.dot_dimension_numbers<[1], [0], [0], [1], [0, 0, 1, 1], [], []>} : vector<8x8xbf16>, vector<8x64xbf16>, vector<8x64xf32> -> vector<8x64xf32>
    %218 = arith.truncf %217 : vector<8x64xf32> to vector<8x64xbf16>
    %c3_157 = arith.constant 3 : index
    %c0_158 = arith.constant 0 : index
    %c0_159 = arith.constant 0 : index
    %219 = vector.load %arg5[%c3_157, %c0_158, %c0_159] : memref<5x64x64xbf16, #tpu.memory_space<vmem>>, vector<1x64x64xbf16>
    %220 = vector.shape_cast %219 : vector<1x64x64xbf16> to vector<64x64xbf16>
    %cst_160 = arith.constant dense<0.000000e+00> : vector<8x64xf32>
    %221 = tpu.matmul %218, %220, %cst_160 {dimension_numbers = #tpu.dot_dimension_numbers<[1], [0], [0], [1], [0, 0, 1, 1], [], []>} : vector<8x64xbf16>, vector<64x64xbf16>, vector<8x64xf32> -> vector<8x64xf32>
    %c3_161 = arith.constant 3 : index
    %c0_162 = arith.constant 0 : index
    %222 = vector.load %arg6[%c3_161, %c0_162] : memref<5x64xf32, #tpu.memory_space<vmem>>, vector<1x64xf32>
    %223 = vector.broadcast %222 : vector<1x64xf32> to vector<8x64xf32>
    %224 = arith.addf %221, %223 : vector<8x64xf32>
    %225 = arith.truncf %224 : vector<8x64xf32> to vector<8x64xbf16>
    %cst_163 = arith.constant dense<0.000000e+00> : vector<8x64xf32>
    %226 = tpu.matmul %189, %225, %cst_163 {dimension_numbers = #tpu.dot_dimension_numbers<[1], [0], [0], [1], [0, 0, 1, 1], [], []>} : vector<8x8xbf16>, vector<8x64xbf16>, vector<8x64xf32> -> vector<8x64xf32>
    %227 = arith.truncf %226 : vector<8x64xf32> to vector<8x64xbf16>
    %c4_164 = arith.constant 4 : index
    %c0_165 = arith.constant 0 : index
    %c0_166 = arith.constant 0 : index
    %228 = vector.load %arg5[%c4_164, %c0_165, %c0_166] : memref<5x64x64xbf16, #tpu.memory_space<vmem>>, vector<1x64x64xbf16>
    %229 = vector.shape_cast %228 : vector<1x64x64xbf16> to vector<64x64xbf16>
    %cst_167 = arith.constant dense<0.000000e+00> : vector<8x64xf32>
    %230 = tpu.matmul %227, %229, %cst_167 {dimension_numbers = #tpu.dot_dimension_numbers<[1], [0], [0], [1], [0, 0, 1, 1], [], []>} : vector<8x64xbf16>, vector<64x64xbf16>, vector<8x64xf32> -> vector<8x64xf32>
    %c4_168 = arith.constant 4 : index
    %c0_169 = arith.constant 0 : index
    %231 = vector.load %arg6[%c4_168, %c0_169] : memref<5x64xf32, #tpu.memory_space<vmem>>, vector<1x64xf32>
    %232 = vector.broadcast %231 : vector<1x64xf32> to vector<8x64xf32>
    %233 = arith.addf %230, %232 : vector<8x64xf32>
    %cst_170 = arith.constant dense<0.000000e+00> : vector<64xf32>
    %234 = vector.multi_reduction <add>, %233, %cst_170 [0] : vector<8x64xf32> to vector<64xf32>
    %235 = vector.shape_cast %234 : vector<64xf32> to vector<1x64xf32>
    %cst_171 = arith.constant 1.250000e-01 : f32
    %236 = vector.broadcast %cst_171 : f32 to vector<1x64xf32>
    %237 = arith.mulf %235, %236 : vector<1x64xf32>
    %cst_172 = arith.constant 0.000000e+00 : f32
    %238 = vector.broadcast %cst_172 : f32 to vector<1x64xf32>
    %239 = tpu.concatenate %237, %238 in 1 : vector<1x64xf32>, vector<1x64xf32> -> vector<1x128xf32>
    %240 = arith.truncf %239 : vector<1x128xf32> to vector<1x128xbf16>
    %c0_173 = arith.constant 0 : index
    %c0_174 = arith.constant 0 : index
    %c0_175 = arith.constant 0 : index
    %241 = vector.load %arg7[%c0_173, %c0_174, %c0_175] : memref<3x128x128xbf16, #tpu.memory_space<vmem>>, vector<1x128x128xbf16>
    %242 = vector.shape_cast %241 : vector<1x128x128xbf16> to vector<128x128xbf16>
    %cst_176 = arith.constant dense<0.000000e+00> : vector<1x128xf32>
    %243 = tpu.matmul %240, %242, %cst_176 {dimension_numbers = #tpu.dot_dimension_numbers<[1], [0], [0], [1], [0, 0, 1, 1], [], []>} : vector<1x128xbf16>, vector<128x128xbf16>, vector<1x128xf32> -> vector<1x128xf32>
    %c0_177 = arith.constant 0 : index
    %c0_178 = arith.constant 0 : index
    %244 = vector.load %arg8[%c0_177, %c0_178] : memref<3x128xf32, #tpu.memory_space<vmem>>, vector<1x128xf32>
    %245 = arith.addf %243, %244 : vector<1x128xf32>
    %cst_179 = arith.constant 0.000000e+00 : f32
    %246 = vector.broadcast %cst_179 : f32 to vector<1x128xf32>
    %247 = arith.maximumf %245, %246 : vector<1x128xf32>
    %248 = arith.truncf %247 : vector<1x128xf32> to vector<1x128xbf16>
    %c1_180 = arith.constant 1 : index
    %c0_181 = arith.constant 0 : index
    %c0_182 = arith.constant 0 : index
    %249 = vector.load %arg7[%c1_180, %c0_181, %c0_182] : memref<3x128x128xbf16, #tpu.memory_space<vmem>>, vector<1x128x128xbf16>
    %250 = vector.shape_cast %249 : vector<1x128x128xbf16> to vector<128x128xbf16>
    %cst_183 = arith.constant dense<0.000000e+00> : vector<1x128xf32>
    %251 = tpu.matmul %248, %250, %cst_183 {dimension_numbers = #tpu.dot_dimension_numbers<[1], [0], [0], [1], [0, 0, 1, 1], [], []>} : vector<1x128xbf16>, vector<128x128xbf16>, vector<1x128xf32> -> vector<1x128xf32>
    %c1_184 = arith.constant 1 : index
    %c0_185 = arith.constant 0 : index
    %252 = vector.load %arg8[%c1_184, %c0_185] : memref<3x128xf32, #tpu.memory_space<vmem>>, vector<1x128xf32>
    %253 = arith.addf %251, %252 : vector<1x128xf32>
    %cst_186 = arith.constant 0.000000e+00 : f32
    %254 = vector.broadcast %cst_186 : f32 to vector<1x128xf32>
    %255 = arith.maximumf %253, %254 : vector<1x128xf32>
    %256 = arith.truncf %255 : vector<1x128xf32> to vector<1x128xbf16>
    %c2_187 = arith.constant 2 : index
    %c0_188 = arith.constant 0 : index
    %c0_189 = arith.constant 0 : index
    %257 = vector.load %arg7[%c2_187, %c0_188, %c0_189] : memref<3x128x128xbf16, #tpu.memory_space<vmem>>, vector<1x128x128xbf16>
    %258 = vector.shape_cast %257 : vector<1x128x128xbf16> to vector<128x128xbf16>
    %cst_190 = arith.constant dense<0.000000e+00> : vector<1x128xf32>
    %259 = tpu.matmul %256, %258, %cst_190 {dimension_numbers = #tpu.dot_dimension_numbers<[1], [0], [0], [1], [0, 0, 1, 1], [], []>} : vector<1x128xbf16>, vector<128x128xbf16>, vector<1x128xf32> -> vector<1x128xf32>
    %c2_191 = arith.constant 2 : index
    %c0_192 = arith.constant 0 : index
    %260 = vector.load %arg8[%c2_191, %c0_192] : memref<3x128xf32, #tpu.memory_space<vmem>>, vector<1x128xf32>
    %261 = arith.addf %259, %260 : vector<1x128xf32>
    %262 = vector.extract_strided_slice %261 {offsets = [0, 0], sizes = [1, 5], strides = [1, 1]} : vector<1x128xf32> to vector<1x5xf32>
    %c0_193 = arith.constant 0 : index
    %c0_194 = arith.constant 0 : index
    %263 = vector.load %arg9[%c0_193, %c0_194] : memref<1x5xf32, #tpu.memory_space<vmem>>, vector<1x5xf32>
    tpu.vector_store %arg9[%c0_193, %c0_194], %262 {strides = array<i32>} : memref<1x5xf32, #tpu.memory_space<vmem>>, vector<1x5xf32>,
    return
  }
}

</mosaic_0001>

<llo_original>
// kernel: classifier_forward.1
$region0: #{classifier_forward.1}
  #allocation0 [shape = 'u32[]', space=smem, size = 0x4, offset = 0x4, fixed_abs, tag = 'smem constant byte address 0x4 - core index']
  #allocation1 [shape = 'u32[144,128]{1,0:T(1,128)}', space=vmem, size = 0x12000, scoped, tag = 'internal scratch']
  #allocation2 [shape = 'f32[64,192]{1,0:T(8,128)}', space=vmem, size = 0x10000, scoped, tag = 'scratch operand']
  #allocation3 [shape = 'f32[64,192]{1,0:T(8,128)}', space=vmem, size = 0x10000, scoped, tag = 'scratch operand']
  %s0 = inlined_call_operand.vmem [shape: bf16[128,192], index: 0, kind: input, shape index: {}]
  %s1 = inlined_call_operand.vmem [shape: f32[8,8], index: 1, kind: input, shape index: {}]
  %s2 = inlined_call_operand.vmem [shape: bf16[4,192,64], index: 2, kind: input, shape index: {}]
  %s3 = inlined_call_operand.vmem [shape: bf16[4,64,64], index: 3, kind: input, shape index: {}]
  %s4 = inlined_call_operand.vmem [shape: f32[8,64], index: 4, kind: input, shape index: {}]
  %s5 = inlined_call_operand.vmem [shape: bf16[5,64,64], index: 5, kind: input, shape index: {}]
  %s6 = inlined_call_operand.vmem [shape: f32[5,64], index: 6, kind: input, shape index: {}]
  %s7 = inlined_call_operand.vmem [shape: bf16[3,128,128], index: 7, kind: input, shape index: {}]
  %s8 = inlined_call_operand.vmem [shape: f32[3,128], index: 8, kind: input, shape index: {}]
  %s9 = inlined_call_operand.hbm [shape: f32[1,5], index: 9, kind: output, shape index: {}]
  %s10 = sld [smem:[#allocation0]]
  $region46: #{classifier_forward.1} parent=0
    _
  %s12 = ssub.s32 1, %s10
  %s13 = scalar_select 0, %s12, %s10
  $region1: #{classifier_forward.1} parent=0
    #allocation4 [shape = 'u8[512]{0}', space=vmem, size = 0x400, scoped, tag = 'output window, operand 0, single buffered']
    #allocation5 [shape = 's32[1]{0}', space=sflag, size = 0x4, scoped, tag = 'scoped memory for classifier_forward.1']
    %14 = vsyncpa [#allocation5], 0
    // Predicated region
    $region2: #{classifier_forward.1} parent=1 // pred_check
      _
    $region3: #{classifier_forward.1} parent=1 // pred_check_branch
      %16 = sbr.rel (0) target = $region5
    $region4: #{classifier_forward.1} parent=1 // pred_region
      _
    $region5: #{classifier_forward.1} parent=1 // pred_fallthru
      _
    // Predicated region
    $region6: #{classifier_forward.1} parent=1 // pred_check
      _
    $region7: #{classifier_forward.1} parent=1 // pred_check_branch
      %18 = sbr.rel (0) target = $region9
    $region8: #{classifier_forward.1} parent=1 // pred_region
      _
    $region9: #{classifier_forward.1} parent=1 // pred_fallthru
      _
    // Predicated region
    $region10: #{classifier_forward.1} parent=1 // pred_check
      _
    $region11: #{classifier_forward.1} parent=1 // pred_check_branch
      %20 = sbr.rel (0) target = $region13
    $region12: #{classifier_forward.1} parent=1 // pred_region
      _
    $region13: #{classifier_forward.1} parent=1 // pred_fallthru
      _
    // Predicated region
    $region14: #{classifier_forward.1} parent=1 // pred_check
      _
    $region15: #{classifier_forward.1} parent=1 // pred_check_branch
      %22 = sbr.rel (0) target = $region17
    $region16: #{classifier_forward.1} parent=1 // pred_region
      _
    $region17: #{classifier_forward.1} parent=1 // pred_fallthru
      _
    // Predicated region
    $region18: #{classifier_forward.1} parent=1 // pred_check
      _
    $region19: #{classifier_forward.1} parent=1 // pred_check_branch
      %24 = sbr.rel (0) target = $region21
    $region20: #{classifier_forward.1} parent=1 // pred_region
      _
    $region21: #{classifier_forward.1} parent=1 // pred_fallthru
      _
    // Predicated region
    $region22: #{classifier_forward.1} parent=1 // pred_check
      _
    $region23: #{classifier_forward.1} parent=1 // pred_check_branch
      %26 = sbr.rel (0) target = $region25
    $region24: #{classifier_forward.1} parent=1 // pred_region
      _
    $region25: #{classifier_forward.1} parent=1 // pred_fallthru
      _
    // Predicated region
    $region26: #{classifier_forward.1} parent=1 // pred_check
      _
    $region27: #{classifier_forward.1} parent=1 // pred_check_branch
      %28 = sbr.rel (0) target = $region29
    $region28: #{classifier_forward.1} parent=1 // pred_region
      _
    $region29: #{classifier_forward.1} parent=1 // pred_fallthru
      _
    // Predicated region
    $region30: #{classifier_forward.1} parent=1 // pred_check
      _
    $region31: #{classifier_forward.1} parent=1 // pred_check_branch
      %30 = sbr.rel (0) target = $region33
    $region32: #{classifier_forward.1} parent=1 // pred_region
      _
    $region33: #{classifier_forward.1} parent=1 // pred_fallthru
      _
    // Predicated region
    $region34: #{classifier_forward.1} parent=1 // pred_check
      _
    $region35: #{classifier_forward.1} parent=1 // pred_check_branch
      %32 = sbr.rel (0) target = $region37
    $region36: #{classifier_forward.1} parent=1 // pred_region
      _
    $region37: #{classifier_forward.1} parent=1 // pred_fallthru
      _
    %v34 = vld [vmem:[%s0] sm:$0xff]
    %v35 = vld [vmem:[%s0 + $0x8] sm:$0xff]
    %v36 = vld [vmem:[%s0 + $0x10] sm:$0xff]
    %v37 = vld [vmem:[%s0 + $0x18] sm:$0xff]
    %v38 = vld [vmem:[%s0 + $0x20] sm:$0xff]
    %v39 = vld [vmem:[%s0 + $0x28] sm:$0xff]
    %v40 = vld [vmem:[%s0 + $0x30] sm:$0xff]
    %v41 = vld [vmem:[%s0 + $0x38] sm:$0xff]
    %v42 = vld [vmem:[%s0 + $0x40] sm:$0xff]
    %v43 = vld [vmem:[%s0 + $0x48] sm:$0xff]
    %v44 = vld [vmem:[%s0 + $0x50] sm:$0xff]
    %v45 = vld [vmem:[%s0 + $0x58] sm:$0xff]
    %v46 = vld [vmem:[%s0 + $0x60] sm:$0xff]
    %v47 = vld [vmem:[%s0 + $0x68] sm:$0xff]
    %v48 = vld [vmem:[%s0 + $0x70] sm:$0xff]
    %v49 = vld [vmem:[%s0 + $0x78] sm:$0xff]
    %v50 = vld [vmem:[%s2] sm:$0xf]
    %v51 = vld [vmem:[%s2 + $0x4] sm:$0xf]
    %v52 = vld [vmem:[%s2 + $0x8] sm:$0xf]
    %v53 = vld [vmem:[%s2 + $0xc] sm:$0xf]
    %v54 = vld [vmem:[%s2 + $0x10] sm:$0xf]
    %v55 = vld [vmem:[%s2 + $0x14] sm:$0xf]
    %v56 = vld [vmem:[%s2 + $0x18] sm:$0xf]
    %v57 = vld [vmem:[%s2 + $0x1c] sm:$0xf]
    %v58 = vld [vmem:[%s2 + $0x20] sm:$0xf]
    %v59 = vld [vmem:[%s2 + $0x24] sm:$0xf]
    %v60 = vld [vmem:[%s2 + $0x28] sm:$0xf]
    %v61 = vld [vmem:[%s2 + $0x2c] sm:$0xf]
    %v62 = vld [vmem:[%s2 + $0x30] sm:$0xf]
    %v63 = vld [vmem:[%s2 + $0x34] sm:$0xf]
    %v64 = vld [vmem:[%s2 + $0x38] sm:$0xf]
    %v65 = vld [vmem:[%s2 + $0x3c] sm:$0xf]
    %v66 = vld [vmem:[%s2 + $0x40] sm:$0xf]
    %v67 = vld [vmem:[%s2 + $0x44] sm:$0xf]
    %v68 = vld [vmem:[%s2 + $0x48] sm:$0xf]
    %v69 = vld [vmem:[%s2 + $0x4c] sm:$0xf]
    %v70 = vld [vmem:[%s2 + $0x50] sm:$0xf]
    %v71 = vld [vmem:[%s2 + $0x54] sm:$0xf]
    %v72 = vld [vmem:[%s2 + $0x58] sm:$0xf]
    %v73 = vld [vmem:[%s2 + $0x5c] sm:$0xf]
    %v74 = vld [vmem:[%s4] sm:$0x1]
    %v75 = vlaneseq
    %v76 = vshrl.u32 %v75, 7
    %v77 = vsub.s32 0, %v76
    %v78 = vrot.slane %v74, %v77
    %v95 = vunpack.c.l.b16 %v34
    %v96 = vunpack.c.h.b16 %v34
    %v97 = vunpack.c.l.b16 %v35
    %v98 = vunpack.c.h.b16 %v35
    %v99 = vunpack.c.l.b16 %v36
    %v100 = vunpack.c.h.b16 %v36
    %v101 = vunpack.c.l.b16 %v37
    %v102 = vunpack.c.h.b16 %v37
    %v103 = vunpack.c.l.b16 %v38
    %v104 = vunpack.c.h.b16 %v38
    %v105 = vunpack.c.l.b16 %v39
    %v106 = vunpack.c.h.b16 %v39
    %v107 = vunpack.c.l.b16 %v40
    %v108 = vunpack.c.h.b16 %v40
    %v109 = vunpack.c.l.b16 %v41
    %v110 = vunpack.c.h.b16 %v41
    %v111 = vunpack.c.l.b16 %v42
    %v112 = vunpack.c.h.b16 %v42
    %v113 = vunpack.c.l.b16 %v43
    %v114 = vunpack.c.h.b16 %v43
    %v115 = vunpack.c.l.b16 %v44
    %v116 = vunpack.c.h.b16 %v44
    %v117 = vunpack.c.l.b16 %v45
    %v118 = vunpack.c.h.b16 %v45
    %v119 = vunpack.c.l.b16 %v46
    %v120 = vunpack.c.h.b16 %v46
    %v121 = vunpack.c.l.b16 %v47
    %v122 = vunpack.c.h.b16 %v47
    %v123 = vunpack.c.l.b16 %v48
    %v124 = vunpack.c.h.b16 %v48
    %v125 = vunpack.c.l.b16 %v49
    %v126 = vunpack.c.h.b16 %v49
    %v127 = vpack.c.b16 %v97, %v95
    %v128 = vpack.c.b16 %v98, %v96
    %v129 = vpack.c.b16 %v101, %v99
    %v130 = vpack.c.b16 %v102, %v100
    %v131 = vpack.c.b16 %v105, %v103
    %v132 = vpack.c.b16 %v106, %v104
    %v133 = vpack.c.b16 %v109, %v107
    %v134 = vpack.c.b16 %v110, %v108
    %v135 = vpack.c.b16 %v113, %v111
    %v136 = vpack.c.b16 %v114, %v112
    %v137 = vpack.c.b16 %v117, %v115
    %v138 = vpack.c.b16 %v118, %v116
    %v139 = vpack.c.b16 %v121, %v119
    %v140 = vpack.c.b16 %v122, %v120
    %v141 = vpack.c.b16 %v125, %v123
    %v142 = vpack.c.b16 %v126, %v124
    %v175 = vunpack.c.l.b16 %v50
    %v176 = vunpack.c.l.b16 %v51
    %v177 = vunpack.c.l.b16 %v52
    %v178 = vunpack.c.l.b16 %v53
    %v179 = vunpack.c.l.b16 %v54
    %v180 = vunpack.c.l.b16 %v55
    %v181 = vunpack.c.l.b16 %v56
    %v182 = vunpack.c.l.b16 %v57
    %v183 = vunpack.c.l.b16 %v58
    %v184 = vunpack.c.l.b16 %v59
    %v185 = vunpack.c.l.b16 %v60
    %v186 = vunpack.c.l.b16 %v61
    %v187 = vunpack.c.l.b16 %v62
    %v188 = vunpack.c.l.b16 %v63
    %v189 = vunpack.c.l.b16 %v64
    %v190 = vunpack.c.l.b16 %v65
    %v191 = vunpack.c.l.b16 %v66
    %v192 = vunpack.c.l.b16 %v67
    %v193 = vunpack.c.l.b16 %v68
    %v194 = vunpack.c.l.b16 %v69
    %v195 = vunpack.c.l.b16 %v70
    %v196 = vunpack.c.l.b16 %v71
    %v197 = vunpack.c.l.b16 %v72
    %v198 = vunpack.c.l.b16 %v73
    %v199 = vpack.c.b16 %v176, %v175
    %v200 = vpack.c.b16 %v178, %v177
    %v201 = vpack.c.b16 %v180, %v179
    %v202 = vpack.c.b16 %v182, %v181
    %v203 = vpack.c.b16 %v184, %v183
    %v204 = vpack.c.b16 %v186, %v185
    %v205 = vpack.c.b16 %v188, %v187
    %v206 = vpack.c.b16 %v190, %v189
    %v207 = vpack.c.b16 %v192, %v191
    %v208 = vpack.c.b16 %v194, %v193
    %v209 = vpack.c.b16 %v196, %v195
    %v210 = vpack.c.b16 %v198, %v197
    %vm223 = vcmask 523264
    %v225 = vsel %vm223, %v128, 0
    %v228 = vsel %vm223, %v130, 0
    %v231 = vsel %vm223, %v132, 0
    %v234 = vsel %vm223, %v134, 0
    %v237 = vsel %vm223, %v136, 0
    %v240 = vsel %vm223, %v138, 0
    %v243 = vsel %vm223, %v140, 0
    %v246 = vsel %vm223, %v142, 0
    %248 = vmatprep.subr.bf16.mxu0 0
    %249 = vmatpush1.bf16.msra.mxu0 %v206
    %250 = vmatprep.subr.bf16.mxu0 0
    %251 = vmatpush1.bf16.msra.mxu0 %v205
    %252 = vmatprep.subr.bf16.mxu0 0
    %253 = vmatpush1.bf16.msra.mxu0 %v204
    %254 = vmatprep.subr.bf16.mxu0 0
    %255 = vmatpush1.bf16.msra.mxu0 %v203
    %256 = vmatprep.subr.bf16.mxu0 0
    %257 = vmatpush1.bf16.msra.mxu0 %v202
    %258 = vmatprep.subr.bf16.mxu0 0
    %259 = vmatpush1.bf16.msra.mxu0 %v201
    %260 = vmatprep.subr.bf16.mxu0 0
    %261 = vmatpush1.bf16.msra.mxu0 %v200
    %262 = vmatprep.subr.bf16.mxu0 0
    %263 = vmatpush1.bf16.msra.mxu0 %v199
    %264 = vmatprep.subr.bf16.mxu0 0
    %265 = vmatpush2.bf16.msra.mxu0 0
    %266 = vmatprep.subr.bf16.mxu0 0
    %267 = vmatpush2.bf16.msra.mxu0 0
    %268 = vmatprep.subr.bf16.mxu0 0
    %269 = vmatpush2.bf16.msra.mxu0 0
    %270 = vmatprep.subr.bf16.mxu0 0
    %271 = vmatpush2.bf16.msra.mxu0 0
    %272 = vmatprep.subr.bf16.mxu0 0
    %273 = vmatpush2.bf16.msra.mxu0 %v210
    %274 = vmatprep.subr.bf16.mxu0 0
    %275 = vmatpush2.bf16.msra.mxu0 %v209
    %276 = vmatprep.subr.bf16.mxu0 0
    %277 = vmatpush2.bf16.msra.mxu0 %v208
    %278 = vmatprep.subr.bf16.mxu0 0
    %279 = vmatpush2.bf16.msra.mxu0 %v207
    %280 = vmatprep.mubr.bf16.mxu0 %v225
    %281 = vmatmul.mubr.bf16.gmra.mxu0 %v127
    %v282 = vpop.f32.mrf.mxu0
    %v283 = vadd.f32 %v78, %v282
    %v284 = vpop.f32.mrf.mxu0
    %v285 = vpop.f32.mrf.mxu0
    %v286 = vadd.f32 %v78, %v285
    %v287 = vpop.f32.mrf.mxu0
    %288 = vmatprep.mubr.bf16.mxu0 %v228
    %289 = vmatmul.mubr.bf16.gmra.mxu0 %v129
    %v290 = vpop.f32.mrf.mxu0
    %v291 = vadd.f32 %v78, %v290
    %v292 = vpop.f32.mrf.mxu0
    %v293 = vpop.f32.mrf.mxu0
    %v294 = vadd.f32 %v78, %v293
    %v295 = vpop.f32.mrf.mxu0
    %296 = vmatprep.mubr.bf16.mxu0 %v231
    %297 = vmatmul.mubr.bf16.gmra.mxu0 %v131
    %v298 = vpop.f32.mrf.mxu0
    %v299 = vadd.f32 %v78, %v298
    %v300 = vpop.f32.mrf.mxu0
    %v301 = vpop.f32.mrf.mxu0
    %v302 = vadd.f32 %v78, %v301
    %v303 = vpop.f32.mrf.mxu0
    %304 = vmatprep.mubr.bf16.mxu0 %v234
    %305 = vmatmul.mubr.bf16.gmra.mxu0 %v133
    %v306 = vpop.f32.mrf.mxu0
    %v307 = vadd.f32 %v78, %v306
    %v308 = vpop.f32.mrf.mxu0
    %v309 = vpop.f32.mrf.mxu0
    %v310 = vadd.f32 %v78, %v309
    %v311 = vpop.f32.mrf.mxu0
    %312 = vmatprep.mubr.bf16.mxu0 %v237
    %313 = vmatmul.mubr.bf16.gmra.mxu0 %v135
    %v314 = vpop.f32.mrf.mxu0
    %v315 = vadd.f32 %v78, %v314
    %v316 = vpop.f32.mrf.mxu0
    %v317 = vpop.f32.mrf.mxu0
    %v318 = vadd.f32 %v78, %v317
    %v319 = vpop.f32.mrf.mxu0
    %320 = vmatprep.mubr.bf16.mxu0 %v240
    %321 = vmatmul.mubr.bf16.gmra.mxu0 %v137
    %v322 = vpop.f32.mrf.mxu0
    %v323 = vadd.f32 %v78, %v322
    %v324 = vpop.f32.mrf.mxu0
    %v325 = vpop.f32.mrf.mxu0
    %v326 = vadd.f32 %v78, %v325
    %v327 = vpop.f32.mrf.mxu0
    %328 = vmatprep.mubr.bf16.mxu0 %v243
    %329 = vmatmul.mubr.bf16.gmra.mxu0 %v139
    %v330 = vpop.f32.mrf.mxu0
    %v331 = vadd.f32 %v78, %v330
    %v332 = vpop.f32.mrf.mxu0
    %v333 = vpop.f32.mrf.mxu0
    %v334 = vadd.f32 %v78, %v333
    %v335 = vpop.f32.mrf.mxu0
    %336 = vmatprep.mubr.bf16.mxu0 %v246
    %337 = vmatmul.mubr.bf16.gmra.mxu0 %v141
    %v338 = vpop.f32.mrf.mxu0
    %v339 = vadd.f32 %v78, %v338
    %v340 = vpop.f32.mrf.mxu0
    %v341 = vpop.f32.mrf.mxu0
    %v342 = vadd.f32 %v78, %v341
    %v343 = vpop.f32.mrf.mxu0
    %344 = vdwg.mxu0
    %v345 = vmax.f32 %v283, 0.0
    %v346 = vmax.f32 %v286, 0.0
    %v347 = vmax.f32 %v291, 0.0
    %v348 = vmax.f32 %v294, 0.0
    %v349 = vmax.f32 %v299, 0.0
    %v350 = vmax.f32 %v302, 0.0
    %v351 = vmax.f32 %v307, 0.0
    %v352 = vmax.f32 %v310, 0.0
    %v353 = vmax.f32 %v315, 0.0
    %v354 = vmax.f32 %v318, 0.0
    %v355 = vmax.f32 %v323, 0.0
    %v356 = vmax.f32 %v326, 0.0
    %v357 = vmax.f32 %v331, 0.0
    %v358 = vmax.f32 %v334, 0.0
    %v359 = vmax.f32 %v339, 0.0
    %v360 = vmax.f32 %v342, 0.0
    %v361 = vmax.f32 %v345, %v346
    %v362 = vmax.f32 %v347, %v346
    %v363 = vmax.f32 %v362, %v348
    %v364 = vmax.f32 %v349, %v348
    %v365 = vmax.f32 %v364, %v350
    %v366 = vmax.f32 %v351, %v350
    %v367 = vmax.f32 %v366, %v352
    %v368 = vmax.f32 %v353, %v352
    %v369 = vmax.f32 %v368, %v354
    %v370 = vmax.f32 %v355, %v354
    %v371 = vmax.f32 %v370, %v356
    %v372 = vmax.f32 %v357, %v356
    %v373 = vmax.f32 %v372, %v358
    %v374 = vmax.f32 %v359, %v358
    %v375 = vmax.f32 %v374, %v360
    %376 = vst.msk [vmem:[#allocation2] sm:$0xff] %vm223, 0.0
    %377 = vst.msk [vmem:[#allocation2 + $0x78] sm:$0xff] %vm223, 0.0
    %379 = vrot.lane.b32.xlu0 %v361, 64
    %v380 = vpop.permute.xlu0 %379
    %vm382 = vcmask 1048064
    %383 = vst.msk [vmem:[#allocation2] sm:$0xff] %vm382, %v380
    %384 = vst.msk [vmem:[#allocation2 + $0x10] sm:$0xff] %vm223, %v361
    %386 = vrot.lane.b32.xlu0 %v363, 64
    %v387 = vpop.permute.xlu0 %386
    %389 = vst.msk [vmem:[#allocation2 + $0x10] sm:$0xff] %vm382, %v387
    %390 = vst.msk [vmem:[#allocation2 + $0x20] sm:$0xff] %vm223, %v363
    %391 = vst.msk [vmem:[#allocation2 + $0x8] sm:$0xff] %vm223, %v363
    %393 = vrot.lane.b32.xlu0 %v365, 64
    %v394 = vpop.permute.xlu0 %393
    %396 = vst.msk [vmem:[#allocation2 + $0x20] sm:$0xff] %vm382, %v394
    %397 = vst.msk [vmem:[#allocation2 + $0x30] sm:$0xff] %vm223, %v365
    %398 = vst.msk [vmem:[#allocation2 + $0x18] sm:$0xff] %vm223, %v365
    %400 = vrot.lane.b32.xlu0 %v367, 64
    %v401 = vpop.permute.xlu0 %400
    %403 = vst.msk [vmem:[#allocation2 + $0x30] sm:$0xff] %vm382, %v401
    %404 = vst.msk [vmem:[#allocation2 + $0x40] sm:$0xff] %vm223, %v367
    %405 = vst.msk [vmem:[#allocation2 + $0x28] sm:$0xff] %vm223, %v367
    %407 = vrot.lane.b32.xlu0 %v369, 64
    %v408 = vpop.permute.xlu0 %407
    %410 = vst.msk [vmem:[#allocation2 + $0x40] sm:$0xff] %vm382, %v408
    %411 = vst.msk [vmem:[#allocation2 + $0x50] sm:$0xff] %vm223, %v369
    %412 = vst.msk [vmem:[#allocation2 + $0x38] sm:$0xff] %vm223, %v369
    %414 = vrot.lane.b32.xlu0 %v371, 64
    %v415 = vpop.permute.xlu0 %414
    %417 = vst.msk [vmem:[#allocation2 + $0x50] sm:$0xff] %vm382, %v415
    %418 = vst.msk [vmem:[#allocation2 + $0x60] sm:$0xff] %vm223, %v371
    %419 = vst.msk [vmem:[#allocation2 + $0x48] sm:$0xff] %vm223, %v371
    %421 = vrot.lane.b32.xlu0 %v373, 64
    %v422 = vpop.permute.xlu0 %421
    %424 = vst.msk [vmem:[#allocation2 + $0x60] sm:$0xff] %vm382, %v422
    %425 = vst.msk [vmem:[#allocation2 + $0x70] sm:$0xff] %vm223, %v373
    %426 = vst.msk [vmem:[#allocation2 + $0x58] sm:$0xff] %vm223, %v373
    %428 = vrot.lane.b32.xlu0 %v375, 64
    %v429 = vpop.permute.xlu0 %428
    %431 = vst.msk [vmem:[#allocation2 + $0x70] sm:$0xff] %vm382, %v429
    %432 = vst.msk [vmem:[#allocation2 + $0x68] sm:$0xff] %vm223, %v375
    %v433 = vld [vmem:[#allocation2] sm:$0xff]
    %v434 = vld [vmem:[#allocation2 + $0x8] sm:$0xff]
    %v435 = vld [vmem:[#allocation2 + $0x10] sm:$0xff]
    %v436 = vld [vmem:[#allocation2 + $0x18] sm:$0xff]
    %v437 = vld [vmem:[#allocation2 + $0x20] sm:$0xff]
    %v438 = vld [vmem:[#allocation2 + $0x28] sm:$0xff]
    %v439 = vld [vmem:[#allocation2 + $0x30] sm:$0xff]
    %v440 = vld [vmem:[#allocation2 + $0x38] sm:$0xff]
    %v441 = vld [vmem:[#allocation2 + $0x40] sm:$0xff]
    %v442 = vld [vmem:[#allocation2 + $0x48] sm:$0xff]
    %v443 = vld [vmem:[#allocation2 + $0x50] sm:$0xff]
    %v444 = vld [vmem:[#allocation2 + $0x58] sm:$0xff]
    %v445 = vld [vmem:[#allocation2 + $0x60] sm:$0xff]
    %v446 = vld [vmem:[#allocation2 + $0x68] sm:$0xff]
    %v447 = vld [vmem:[#allocation2 + $0x70] sm:$0xff]
    %v448 = vld [vmem:[#allocation2 + $0x78] sm:$0xff]
    %v449 = vpack.c.bf16 %v435, %v433
    %v450 = vpack.c.bf16 %v436, %v434
    %v451 = vpack.c.bf16 %v439, %v437
    %v452 = vpack.c.bf16 %v440, %v438
    %v453 = vpack.c.bf16 %v443, %v441
    %v454 = vpack.c.bf16 %v444, %v442
    %v455 = vpack.c.bf16 %v447, %v445
    %v456 = vpack.c.bf16 %v448, %v446
    %s457 = scalar_lea.vmem %s2, 96
    %v458 = vld [vmem:[%s457] sm:$0xf]
    %v459 = vld [vmem:[%s457 + $0x4] sm:$0xf]
    %v460 = vld [vmem:[%s457 + $0x8] sm:$0xf]
    %v461 = vld [vmem:[%s457 + $0xc] sm:$0xf]
    %v462 = vld [vmem:[%s457 + $0x10] sm:$0xf]
    %v463 = vld [vmem:[%s457 + $0x14] sm:$0xf]
    %v464 = vld [vmem:[%s457 + $0x18] sm:$0xf]
    %v465 = vld [vmem:[%s457 + $0x1c] sm:$0xf]
    %v466 = vld [vmem:[%s457 + $0x20] sm:$0xf]
    %v467 = vld [vmem:[%s457 + $0x24] sm:$0xf]
    %v468 = vld [vmem:[%s457 + $0x28] sm:$0xf]
    %v469 = vld [vmem:[%s457 + $0x2c] sm:$0xf]
    %v470 = vld [vmem:[%s457 + $0x30] sm:$0xf]
    %v471 = vld [vmem:[%s457 + $0x34] sm:$0xf]
    %v472 = vld [vmem:[%s457 + $0x38] sm:$0xf]
    %v473 = vld [vmem:[%s457 + $0x3c] sm:$0xf]
    %v474 = vld [vmem:[%s457 + $0x40] sm:$0xf]
    %v475 = vld [vmem:[%s457 + $0x44] sm:$0xf]
    %v476 = vld [vmem:[%s457 + $0x48] sm:$0xf]
    %v477 = vld [vmem:[%s457 + $0x4c] sm:$0xf]
    %v478 = vld [vmem:[%s457 + $0x50] sm:$0xf]
    %v479 = vld [vmem:[%s457 + $0x54] sm:$0xf]
    %v480 = vld [vmem:[%s457 + $0x58] sm:$0xf]
    %v481 = vld [vmem:[%s457 + $0x5c] sm:$0xf]
    %v482 = vld [vmem:[%s4 + $0x1] sm:$0x1]
    %v483 = vlaneseq
    %v484 = vshrl.u32 %v483, 7
    %v485 = vsub.s32 0, %v484
    %v486 = vrot.slane %v482, %v485
    %v511 = vunpack.c.l.b16 %v458
    %v512 = vunpack.c.l.b16 %v459
    %v513 = vunpack.c.l.b16 %v460
    %v514 = vunpack.c.l.b16 %v461
    %v515 = vunpack.c.l.b16 %v462
    %v516 = vunpack.c.l.b16 %v463
    %v517 = vunpack.c.l.b16 %v464
    %v518 = vunpack.c.l.b16 %v465
    %v519 = vunpack.c.l.b16 %v466
    %v520 = vunpack.c.l.b16 %v467
    %v521 = vunpack.c.l.b16 %v468
    %v522 = vunpack.c.l.b16 %v469
    %v523 = vunpack.c.l.b16 %v470
    %v524 = vunpack.c.l.b16 %v471
    %v525 = vunpack.c.l.b16 %v472
    %v526 = vunpack.c.l.b16 %v473
    %v527 = vunpack.c.l.b16 %v474
    %v528 = vunpack.c.l.b16 %v475
    %v529 = vunpack.c.l.b16 %v476
    %v530 = vunpack.c.l.b16 %v477
    %v531 = vunpack.c.l.b16 %v478
    %v532 = vunpack.c.l.b16 %v479
    %v533 = vunpack.c.l.b16 %v480
    %v534 = vunpack.c.l.b16 %v481
    %v535 = vpack.c.b16 %v512, %v511
    %v536 = vpack.c.b16 %v514, %v513
    %v537 = vpack.c.b16 %v516, %v515
    %v538 = vpack.c.b16 %v518, %v517
    %v539 = vpack.c.b16 %v520, %v519
    %v540 = vpack.c.b16 %v522, %v521
    %v541 = vpack.c.b16 %v524, %v523
    %v542 = vpack.c.b16 %v526, %v525
    %v543 = vpack.c.b16 %v528, %v527
    %v544 = vpack.c.b16 %v530, %v529
    %v545 = vpack.c.b16 %v532, %v531
    %v546 = vpack.c.b16 %v534, %v533
    %v560 = vsel %vm223, %v450, 0
    %v563 = vsel %vm223, %v452, 0
    %v566 = vsel %vm223, %v454, 0
    %v569 = vsel %vm223, %v456, 0
    %571 = vmatprep.subr.bf16.mxu0 0
    %572 = vmatpush1.bf16.msra.mxu0 %v542
    %573 = vmatprep.subr.bf16.mxu0 0
    %574 = vmatpush1.bf16.msra.mxu0 %v541
    %575 = vmatprep.subr.bf16.mxu0 0
    %576 = vmatpush1.bf16.msra.mxu0 %v540
    %577 = vmatprep.subr.bf16.mxu0 0
    %578 = vmatpush1.bf16.msra.mxu0 %v539
    %579 = vmatprep.subr.bf16.mxu0 0
    %580 = vmatpush1.bf16.msra.mxu0 %v538
    %581 = vmatprep.subr.bf16.mxu0 0
    %582 = vmatpush1.bf16.msra.mxu0 %v537
    %583 = vmatprep.subr.bf16.mxu0 0
    %584 = vmatpush1.bf16.msra.mxu0 %v536
    %585 = vmatprep.subr.bf16.mxu0 0
    %586 = vmatpush1.bf16.msra.mxu0 %v535
    %587 = vmatprep.subr.bf16.mxu0 0
    %588 = vmatpush2.bf16.msra.mxu0 0
    %589 = vmatprep.subr.bf16.mxu0 0
    %590 = vmatpush2.bf16.msra.mxu0 0
    %591 = vmatprep.subr.bf16.mxu0 0
    %592 = vmatpush2.bf16.msra.mxu0 0
    %593 = vmatprep.subr.bf16.mxu0 0
    %594 = vmatpush2.bf16.msra.mxu0 0
    %595 = vmatprep.subr.bf16.mxu0 0
    %596 = vmatpush2.bf16.msra.mxu0 %v546
    %597 = vmatprep.subr.bf16.mxu0 0
    %598 = vmatpush2.bf16.msra.mxu0 %v545
    %599 = vmatprep.subr.bf16.mxu0 0
    %600 = vmatpush2.bf16.msra.mxu0 %v544
    %601 = vmatprep.subr.bf16.mxu0 0
    %602 = vmatpush2.bf16.msra.mxu0 %v543
    %603 = vmatprep.mubr.bf16.mxu0 %v560
    %604 = vmatmul.mubr.bf16.gmra.mxu0 %v449
    %v605 = vpop.f32.mrf.mxu0
    %v606 = vadd.f32 %v486, %v605
    %v607 = vpop.f32.mrf.mxu0
    %v608 = vpop.f32.mrf.mxu0
    %v609 = vadd.f32 %v486, %v608
    %v610 = vpop.f32.mrf.mxu0
    %611 = vmatprep.mubr.bf16.mxu0 %v563
    %612 = vmatmul.mubr.bf16.gmra.mxu0 %v451
    %v613 = vpop.f32.mrf.mxu0
    %v614 = vadd.f32 %v486, %v613
    %v615 = vpop.f32.mrf.mxu0
    %v616 = vpop.f32.mrf.mxu0
    %v617 = vadd.f32 %v486, %v616
    %v618 = vpop.f32.mrf.mxu0
    %619 = vmatprep.mubr.bf16.mxu0 %v566
    %620 = vmatmul.mubr.bf16.gmra.mxu0 %v453
    %v621 = vpop.f32.mrf.mxu0
    %v622 = vadd.f32 %v486, %v621
    %v623 = vpop.f32.mrf.mxu0
    %v624 = vpop.f32.mrf.mxu0
    %v625 = vadd.f32 %v486, %v624
    %v626 = vpop.f32.mrf.mxu0
    %627 = vmatprep.mubr.bf16.mxu0 %v569
    %628 = vmatmul.mubr.bf16.gmra.mxu0 %v455
    %v629 = vpop.f32.mrf.mxu0
    %v630 = vadd.f32 %v486, %v629
    %v631 = vpop.f32.mrf.mxu0
    %v632 = vpop.f32.mrf.mxu0
    %v633 = vadd.f32 %v486, %v632
    %v634 = vpop.f32.mrf.mxu0
    %635 = vdwg.mxu0
    %v636 = vmax.f32 %v606, 0.0
    %v637 = vmax.f32 %v609, 0.0
    %v638 = vmax.f32 %v614, 0.0
    %v639 = vmax.f32 %v617, 0.0
    %v640 = vmax.f32 %v622, 0.0
    %v641 = vmax.f32 %v625, 0.0
    %v642 = vmax.f32 %v630, 0.0
    %v643 = vmax.f32 %v633, 0.0
    %v644 = vmax.f32 %v636, %v637
    %v645 = vmax.f32 %v638, %v637
    %v646 = vmax.f32 %v645, %v639
    %v647 = vmax.f32 %v640, %v639
    %v648 = vmax.f32 %v647, %v641
    %v649 = vmax.f32 %v642, %v641
    %v650 = vmax.f32 %v649, %v643
    %651 = vst.msk [vmem:[#allocation3] sm:$0xff] %vm223, 0.0
    %652 = vst.msk [vmem:[#allocation3 + $0x38] sm:$0xff] %vm223, 0.0
    %654 = vrot.lane.b32.xlu0 %v644, 64
    %v655 = vpop.permute.xlu0 %654
    %657 = vst.msk [vmem:[#allocation3] sm:$0xff] %vm382, %v655
    %658 = vst.msk [vmem:[#allocation3 + $0x10] sm:$0xff] %vm223, %v644
    %660 = vrot.lane.b32.xlu0 %v646, 64
    %v661 = vpop.permute.xlu0 %660
    %663 = vst.msk [vmem:[#allocation3 + $0x10] sm:$0xff] %vm382, %v661
    %664 = vst.msk [vmem:[#allocation3 + $0x20] sm:$0xff] %vm223, %v646
    %665 = vst.msk [vmem:[#allocation3 + $0x8] sm:$0xff] %vm223, %v646
    %667 = vrot.lane.b32.xlu0 %v648, 64
    %v668 = vpop.permute.xlu0 %667
    %670 = vst.msk [vmem:[#allocation3 + $0x20] sm:$0xff] %vm382, %v668
    %671 = vst.msk [vmem:[#allocation3 + $0x30] sm:$0xff] %vm223, %v648
    %672 = vst.msk [vmem:[#allocation3 + $0x18] sm:$0xff] %vm223, %v648
    %674 = vrot.lane.b32.xlu0 %v650, 64
    %v675 = vpop.permute.xlu0 %674
    %677 = vst.msk [vmem:[#allocation3 + $0x30] sm:$0xff] %vm382, %v675
    %678 = vst.msk [vmem:[#allocation3 + $0x28] sm:$0xff] %vm223, %v650
    %v679 = vld [vmem:[#allocation3] sm:$0xff]
    %v680 = vld [vmem:[#allocation3 + $0x8] sm:$0xff]
    %v681 = vld [vmem:[#allocation3 + $0x10] sm:$0xff]
    %v682 = vld [vmem:[#allocation3 + $0x18] sm:$0xff]
    %v683 = vld [vmem:[#allocation3 + $0x20] sm:$0xff]
    %v684 = vld [vmem:[#allocation3 + $0x28] sm:$0xff]
    %v685 = vld [vmem:[#allocation3 + $0x30] sm:$0xff]
    %v686 = vld [vmem:[#allocation3 + $0x38] sm:$0xff]
    %v687 = vpack.c.bf16 %v681, %v679
    %v688 = vpack.c.bf16 %v682, %v680
    %v689 = vpack.c.bf16 %v685, %v683
    %v690 = vpack.c.bf16 %v686, %v684
    %s691 = scalar_lea.vmem %s2, 192
    %v692 = vld [vmem:[%s691] sm:$0xf]
    %v693 = vld [vmem:[%s691 + $0x4] sm:$0xf]
    %v694 = vld [vmem:[%s691 + $0x8] sm:$0xf]
    %v695 = vld [vmem:[%s691 + $0xc] sm:$0xf]
    %v696 = vld [vmem:[%s691 + $0x10] sm:$0xf]
    %v697 = vld [vmem:[%s691 + $0x14] sm:$0xf]
    %v698 = vld [vmem:[%s691 + $0x18] sm:$0xf]
    %v699 = vld [vmem:[%s691 + $0x1c] sm:$0xf]
    %v700 = vld [vmem:[%s691 + $0x20] sm:$0xf]
    %v701 = vld [vmem:[%s691 + $0x24] sm:$0xf]
    %v702 = vld [vmem:[%s691 + $0x28] sm:$0xf]
    %v703 = vld [vmem:[%s691 + $0x2c] sm:$0xf]
    %v704 = vld [vmem:[%s691 + $0x30] sm:$0xf]
    %v705 = vld [vmem:[%s691 + $0x34] sm:$0xf]
    %v706 = vld [vmem:[%s691 + $0x38] sm:$0xf]
    %v707 = vld [vmem:[%s691 + $0x3c] sm:$0xf]
    %v708 = vld [vmem:[%s691 + $0x40] sm:$0xf]
    %v709 = vld [vmem:[%s691 + $0x44] sm:$0xf]
    %v710 = vld [vmem:[%s691 + $0x48] sm:$0xf]
    %v711 = vld [vmem:[%s691 + $0x4c] sm:$0xf]
    %v712 = vld [vmem:[%s691 + $0x50] sm:$0xf]
    %v713 = vld [vmem:[%s691 + $0x54] sm:$0xf]
    %v714 = vld [vmem:[%s691 + $0x58] sm:$0xf]
    %v715 = vld [vmem:[%s691 + $0x5c] sm:$0xf]
    %v716 = vld [vmem:[%s4 + $0x2] sm:$0x1]
    %v717 = vlaneseq
    %v718 = vshrl.u32 %v717, 7
    %v719 = vsub.s32 0, %v718
    %v720 = vrot.slane %v716, %v719
    %v745 = vunpack.c.l.b16 %v692
    %v746 = vunpack.c.l.b16 %v693
    %v747 = vunpack.c.l.b16 %v694
    %v748 = vunpack.c.l.b16 %v695
    %v749 = vunpack.c.l.b16 %v696
    %v750 = vunpack.c.l.b16 %v697
    %v751 = vunpack.c.l.b16 %v698
    %v752 = vunpack.c.l.b16 %v699
    %v753 = vunpack.c.l.b16 %v700
    %v754 = vunpack.c.l.b16 %v701
    %v755 = vunpack.c.l.b16 %v702
    %v756 = vunpack.c.l.b16 %v703
    %v757 = vunpack.c.l.b16 %v704
    %v758 = vunpack.c.l.b16 %v705
    %v759 = vunpack.c.l.b16 %v706
    %v760 = vunpack.c.l.b16 %v707
    %v761 = vunpack.c.l.b16 %v708
    %v762 = vunpack.c.l.b16 %v709
    %v763 = vunpack.c.l.b16 %v710
    %v764 = vunpack.c.l.b16 %v711
    %v765 = vunpack.c.l.b16 %v712
    %v766 = vunpack.c.l.b16 %v713
    %v767 = vunpack.c.l.b16 %v714
    %v768 = vunpack.c.l.b16 %v715
    %v769 = vpack.c.b16 %v746, %v745
    %v770 = vpack.c.b16 %v748, %v747
    %v771 = vpack.c.b16 %v750, %v749
    %v772 = vpack.c.b16 %v752, %v751
    %v773 = vpack.c.b16 %v754, %v753
    %v774 = vpack.c.b16 %v756, %v755
    %v775 = vpack.c.b16 %v758, %v757
    %v776 = vpack.c.b16 %v760, %v759
    %v777 = vpack.c.b16 %v762, %v761
    %v778 = vpack.c.b16 %v764, %v763
    %v779 = vpack.c.b16 %v766, %v765
    %v780 = vpack.c.b16 %v768, %v767
    %v794 = vsel %vm223, %v688, 0
    %v797 = vsel %vm223, %v690, 0
    %799 = vmatprep.subr.bf16.mxu0 0
    %800 = vmatpush1.bf16.msra.mxu0 %v776
    %801 = vmatprep.subr.bf16.mxu0 0
    %802 = vmatpush1.bf16.msra.mxu0 %v775
    %803 = vmatprep.subr.bf16.mxu0 0
    %804 = vmatpush1.bf16.msra.mxu0 %v774
    %805 = vmatprep.subr.bf16.mxu0 0
    %806 = vmatpush1.bf16.msra.mxu0 %v773
    %807 = vmatprep.subr.bf16.mxu0 0
    %808 = vmatpush1.bf16.msra.mxu0 %v772
    %809 = vmatprep.subr.bf16.mxu0 0
    %810 = vmatpush1.bf16.msra.mxu0 %v771
    %811 = vmatprep.subr.bf16.mxu0 0
    %812 = vmatpush1.bf16.msra.mxu0 %v770
    %813 = vmatprep.subr.bf16.mxu0 0
    %814 = vmatpush1.bf16.msra.mxu0 %v769
    %815 = vmatprep.subr.bf16.mxu0 0
    %816 = vmatpush2.bf16.msra.mxu0 0
    %817 = vmatprep.subr.bf16.mxu0 0
    %818 = vmatpush2.bf16.msra.mxu0 0
    %819 = vmatprep.subr.bf16.mxu0 0
    %820 = vmatpush2.bf16.msra.mxu0 0
    %821 = vmatprep.subr.bf16.mxu0 0
    %822 = vmatpush2.bf16.msra.mxu0 0
    %823 = vmatprep.subr.bf16.mxu0 0
    %824 = vmatpush2.bf16.msra.mxu0 %v780
    %825 = vmatprep.subr.bf16.mxu0 0
    %826 = vmatpush2.bf16.msra.mxu0 %v779
    %827 = vmatprep.subr.bf16.mxu0 0
    %828 = vmatpush2.bf16.msra.mxu0 %v778
    %829 = vmatprep.subr.bf16.mxu0 0
    %830 = vmatpush2.bf16.msra.mxu0 %v777
    %831 = vmatprep.mubr.bf16.mxu0 %v794
    %832 = vmatmul.mubr.bf16.gmra.mxu0 %v687
    %v833 = vpop.f32.mrf.mxu0
    %v834 = vadd.f32 %v720, %v833
    %v835 = vpop.f32.mrf.mxu0
    %v836 = vpop.f32.mrf.mxu0
    %v837 = vadd.f32 %v720, %v836
    %v838 = vpop.f32.mrf.mxu0
    %839 = vmatprep.mubr.bf16.mxu0 %v797
    %840 = vmatmul.mubr.bf16.gmra.mxu0 %v689
    %v841 = vpop.f32.mrf.mxu0
    %v842 = vadd.f32 %v720, %v841
    %v843 = vpop.f32.mrf.mxu0
    %v844 = vpop.f32.mrf.mxu0
    %v845 = vadd.f32 %v720, %v844
    %v846 = vpop.f32.mrf.mxu0
    %847 = vdwg.mxu0
    %v848 = vmax.f32 %v834, 0.0
    %v849 = vmax.f32 %v837, 0.0
    %v850 = vmax.f32 %v842, 0.0
    %v851 = vmax.f32 %v845, 0.0
    %v852 = vmax.f32 %v848, %v849
    %v853 = vmax.f32 %v850, %v849
    %v854 = vmax.f32 %v853, %v851
    %855 = vst.msk [vmem:[#allocation2] sm:$0xff] %vm223, 0.0
    %856 = vst.msk [vmem:[#allocation2 + $0x18] sm:$0xff] %vm223, 0.0
    %858 = vrot.lane.b32.xlu0 %v852, 64
    %v859 = vpop.permute.xlu0 %858
    %861 = vst.msk [vmem:[#allocation2] sm:$0xff] %vm382, %v859
    %862 = vst.msk [vmem:[#allocation2 + $0x10] sm:$0xff] %vm223, %v852
    %864 = vrot.lane.b32.xlu0 %v854, 64
    %v865 = vpop.permute.xlu0 %864
    %867 = vst.msk [vmem:[#allocation2 + $0x10] sm:$0xff] %vm382, %v865
    %868 = vst.msk [vmem:[#allocation2 + $0x8] sm:$0xff] %vm223, %v854
    %v869 = vld [vmem:[#allocation2] sm:$0xff]
    %v870 = vld [vmem:[#allocation2 + $0x8] sm:$0xff]
    %v871 = vld [vmem:[#allocation2 + $0x10] sm:$0xff]
    %v872 = vld [vmem:[#allocation2 + $0x18] sm:$0xff]
    %v873 = vpack.c.bf16 %v871, %v869
    %v874 = vpack.c.bf16 %v872, %v870
    %s875 = scalar_lea.vmem %s2, 288
    %v876 = vld [vmem:[%s875] sm:$0xf]
    %v877 = vld [vmem:[%s875 + $0x4] sm:$0xf]
    %v878 = vld [vmem:[%s875 + $0x8] sm:$0xf]
    %v879 = vld [vmem:[%s875 + $0xc] sm:$0xf]
    %v880 = vld [vmem:[%s875 + $0x10] sm:$0xf]
    %v881 = vld [vmem:[%s875 + $0x14] sm:$0xf]
    %v882 = vld [vmem:[%s875 + $0x18] sm:$0xf]
    %v883 = vld [vmem:[%s875 + $0x1c] sm:$0xf]
    %v884 = vld [vmem:[%s875 + $0x20] sm:$0xf]
    %v885 = vld [vmem:[%s875 + $0x24] sm:$0xf]
    %v886 = vld [vmem:[%s875 + $0x28] sm:$0xf]
    %v887 = vld [vmem:[%s875 + $0x2c] sm:$0xf]
    %v888 = vld [vmem:[%s875 + $0x30] sm:$0xf]
    %v889 = vld [vmem:[%s875 + $0x34] sm:$0xf]
    %v890 = vld [vmem:[%s875 + $0x38] sm:$0xf]
    %v891 = vld [vmem:[%s875 + $0x3c] sm:$0xf]
    %v892 = vld [vmem:[%s875 + $0x40] sm:$0xf]
    %v893 = vld [vmem:[%s875 + $0x44] sm:$0xf]
    %v894 = vld [vmem:[%s875 + $0x48] sm:$0xf]
    %v895 = vld [vmem:[%s875 + $0x4c] sm:$0xf]
    %v896 = vld [vmem:[%s875 + $0x50] sm:$0xf]
    %v897 = vld [vmem:[%s875 + $0x54] sm:$0xf]
    %v898 = vld [vmem:[%s875 + $0x58] sm:$0xf]
    %v899 = vld [vmem:[%s875 + $0x5c] sm:$0xf]
    %v900 = vld [vmem:[%s4 + $0x3] sm:$0x1]
    %v901 = vlaneseq
    %v902 = vshrl.u32 %v901, 7
    %v903 = vsub.s32 0, %v902
    %v904 = vrot.slane %v900, %v903
    %v929 = vunpack.c.l.b16 %v876
    %v930 = vunpack.c.l.b16 %v877
    %v931 = vunpack.c.l.b16 %v878
    %v932 = vunpack.c.l.b16 %v879
    %v933 = vunpack.c.l.b16 %v880
    %v934 = vunpack.c.l.b16 %v881
    %v935 = vunpack.c.l.b16 %v882
    %v936 = vunpack.c.l.b16 %v883
    %v937 = vunpack.c.l.b16 %v884
    %v938 = vunpack.c.l.b16 %v885
    %v939 = vunpack.c.l.b16 %v886
    %v940 = vunpack.c.l.b16 %v887
    %v941 = vunpack.c.l.b16 %v888
    %v942 = vunpack.c.l.b16 %v889
    %v943 = vunpack.c.l.b16 %v890
    %v944 = vunpack.c.l.b16 %v891
    %v945 = vunpack.c.l.b16 %v892
    %v946 = vunpack.c.l.b16 %v893
    %v947 = vunpack.c.l.b16 %v894
    %v948 = vunpack.c.l.b16 %v895
    %v949 = vunpack.c.l.b16 %v896
    %v950 = vunpack.c.l.b16 %v897
    %v951 = vunpack.c.l.b16 %v898
    %v952 = vunpack.c.l.b16 %v899
    %v953 = vpack.c.b16 %v930, %v929
    %v954 = vpack.c.b16 %v932, %v931
    %v955 = vpack.c.b16 %v934, %v933
    %v956 = vpack.c.b16 %v936, %v935
    %v957 = vpack.c.b16 %v938, %v937
    %v958 = vpack.c.b16 %v940, %v939
    %v959 = vpack.c.b16 %v942, %v941
    %v960 = vpack.c.b16 %v944, %v943
    %v961 = vpack.c.b16 %v946, %v945
    %v962 = vpack.c.b16 %v948, %v947
    %v963 = vpack.c.b16 %v950, %v949
    %v964 = vpack.c.b16 %v952, %v951
    %v978 = vsel %vm223, %v874, 0
    %980 = vmatprep.subr.bf16.mxu0 0
    %981 = vmatpush1.bf16.msra.mxu0 %v960
    %982 = vmatprep.subr.bf16.mxu0 0
    %983 = vmatpush1.bf16.msra.mxu0 %v959
    %984 = vmatprep.subr.bf16.mxu0 0
    %985 = vmatpush1.bf16.msra.mxu0 %v958
    %986 = vmatprep.subr.bf16.mxu0 0
    %987 = vmatpush1.bf16.msra.mxu0 %v957
    %988 = vmatprep.subr.bf16.mxu0 0
    %989 = vmatpush1.bf16.msra.mxu0 %v956
    %990 = vmatprep.subr.bf16.mxu0 0
    %991 = vmatpush1.bf16.msra.mxu0 %v955
    %992 = vmatprep.subr.bf16.mxu0 0
    %993 = vmatpush1.bf16.msra.mxu0 %v954
    %994 = vmatprep.subr.bf16.mxu0 0
    %995 = vmatpush1.bf16.msra.mxu0 %v953
    %996 = vmatprep.subr.bf16.mxu0 0
    %997 = vmatpush2.bf16.msra.mxu0 0
    %998 = vmatprep.subr.bf16.mxu0 0
    %999 = vmatpush2.bf16.msra.mxu0 0
    %1000 = vmatprep.subr.bf16.mxu0 0
    %1001 = vmatpush2.bf16.msra.mxu0 0
    %1002 = vmatprep.subr.bf16.mxu0 0
    %1003 = vmatpush2.bf16.msra.mxu0 0
    %1004 = vmatprep.subr.bf16.mxu0 0
    %1005 = vmatpush2.bf16.msra.mxu0 %v964
    %1006 = vmatprep.subr.bf16.mxu0 0
    %1007 = vmatpush2.bf16.msra.mxu0 %v963
    %1008 = vmatprep.subr.bf16.mxu0 0
    %1009 = vmatpush2.bf16.msra.mxu0 %v962
    %1010 = vmatprep.subr.bf16.mxu0 0
    %1011 = vmatpush2.bf16.msra.mxu0 %v961
    %1012 = vmatprep.mubr.bf16.mxu0 %v978
    %1013 = vmatmul.mubr.bf16.gmra.mxu0 %v873
    %v1014 = vpop.f32.mrf.mxu0
    %v1015 = vadd.f32 %v904, %v1014
    %v1016 = vpop.f32.mrf.mxu0
    %v1017 = vpop.f32.mrf.mxu0
    %v1018 = vadd.f32 %v904, %v1017
    %v1019 = vpop.f32.mrf.mxu0
    %1020 = vdwg.mxu0
    %v1021 = vmax.f32 %v1015, 0.0
    %v1022 = vmax.f32 %v1018, 0.0
    %v1023 = vmax.f32 %v1021, %v1022
    %v1024 = vpack.c.bf16 %v1023, %v1023
    %v1025 = vld [vmem:[%s3] sm:$0xf]
    %v1026 = vld [vmem:[%s3 + $0x4] sm:$0xf]
    %v1027 = vld [vmem:[%s3 + $0x8] sm:$0xf]
    %v1028 = vld [vmem:[%s3 + $0xc] sm:$0xf]
    %v1029 = vld [vmem:[%s3 + $0x10] sm:$0xf]
    %v1030 = vld [vmem:[%s3 + $0x14] sm:$0xf]
    %v1031 = vld [vmem:[%s3 + $0x18] sm:$0xf]
    %v1032 = vld [vmem:[%s3 + $0x1c] sm:$0xf]
    %v1033 = vld [vmem:[%s4 + $0x4] sm:$0x1]
    %v1034 = vlaneseq
    %v1035 = vshrl.u32 %v1034, 7
    %v1036 = vsub.s32 0, %v1035
    %v1037 = vrot.slane %v1033, %v1036
    %v1046 = vunpack.c.l.b16 %v1025
    %v1047 = vunpack.c.l.b16 %v1026
    %v1048 = vunpack.c.l.b16 %v1027
    %v1049 = vunpack.c.l.b16 %v1028
    %v1050 = vunpack.c.l.b16 %v1029
    %v1051 = vunpack.c.l.b16 %v1030
    %v1052 = vunpack.c.l.b16 %v1031
    %v1053 = vunpack.c.l.b16 %v1032
    %v1054 = vpack.c.b16 %v1047, %v1046
    %v1055 = vpack.c.b16 %v1049, %v1048
    %v1056 = vpack.c.b16 %v1051, %v1050
    %v1057 = vpack.c.b16 %v1053, %v1052
    %v1063 = vsel %vm223, %v1024, 0
    %1065 = vmatprep.subr.bf16.mxu0 0
    %1066 = vmatpush1.bf16.msra.mxu0 0
    %1067 = vmatprep.subr.bf16.mxu0 0
    %1068 = vmatpush1.bf16.msra.mxu0 0
    %1069 = vmatprep.subr.bf16.mxu0 0
    %1070 = vmatpush1.bf16.msra.mxu0 0
    %1071 = vmatprep.subr.bf16.mxu0 0
    %1072 = vmatpush1.bf16.msra.mxu0 0
    %1073 = vmatprep.subr.bf16.mxu0 0
    %1074 = vmatpush1.bf16.msra.mxu0 %v1057
    %1075 = vmatprep.subr.bf16.mxu0 0
    %1076 = vmatpush1.bf16.msra.mxu0 %v1056
    %1077 = vmatprep.subr.bf16.mxu0 0
    %1078 = vmatpush1.bf16.msra.mxu0 %v1055
    %1079 = vmatprep.subr.bf16.mxu0 0
    %1080 = vmatpush1.bf16.msra.mxu0 %v1054
    %1081 = vmatprep.subr.bf16.mxu0 0
    %1082 = vmatpush2.bf16.msra.mxu0 0
    %1083 = vmatprep.subr.bf16.mxu0 0
    %1084 = vmatpush2.bf16.msra.mxu0 0
    %1085 = vmatprep.subr.bf16.mxu0 0
    %1086 = vmatpush2.bf16.msra.mxu0 0
    %1087 = vmatprep.subr.bf16.mxu0 0
    %1088 = vmatpush2.bf16.msra.mxu0 0
    %1089 = vmatprep.subr.bf16.mxu0 0
    %1090 = vmatpush2.bf16.msra.mxu0 0
    %1091 = vmatprep.subr.bf16.mxu0 0
    %1092 = vmatpush2.bf16.msra.mxu0 0
    %1093 = vmatprep.subr.bf16.mxu0 0
    %1094 = vmatpush2.bf16.msra.mxu0 0
    %1095 = vmatprep.subr.bf16.mxu0 0
    %1096 = vmatpush2.bf16.msra.mxu0 0
    %1097 = vmatprep.mubr.bf16.mxu0 0
    %1098 = vmatmul.mubr.bf16.gmra.mxu0 %v1063
    %v1099 = vpop.f32.mrf.mxu0
    %v1100 = vadd.f32 %v1037, %v1099
    %v1101 = vpop.f32.mrf.mxu0
    %v1102 = vpop.f32.mrf.mxu0
    %v1103 = vpop.f32.mrf.mxu0
    %1104 = vdwg.mxu0
    %v1105 = vmax.f32 %v1100, 0.0
    %v1106 = vpack.c.bf16 %v1105, %v1105
    %s1107 = scalar_lea.vmem %s3, 32
    %v1108 = vld [vmem:[%s1107] sm:$0xf]
    %v1109 = vld [vmem:[%s1107 + $0x4] sm:$0xf]
    %v1110 = vld [vmem:[%s1107 + $0x8] sm:$0xf]
    %v1111 = vld [vmem:[%s1107 + $0xc] sm:$0xf]
    %v1112 = vld [vmem:[%s1107 + $0x10] sm:$0xf]
    %v1113 = vld [vmem:[%s1107 + $0x14] sm:$0xf]
    %v1114 = vld [vmem:[%s1107 + $0x18] sm:$0xf]
    %v1115 = vld [vmem:[%s1107 + $0x1c] sm:$0xf]
    %v1116 = vld [vmem:[%s4 + $0x5] sm:$0x1]
    %v1117 = vlaneseq
    %v1118 = vshrl.u32 %v1117, 7
    %v1119 = vsub.s32 0, %v1118
    %v1120 = vrot.slane %v1116, %v1119
    %v1129 = vunpack.c.l.b16 %v1108
    %v1130 = vunpack.c.l.b16 %v1109
    %v1131 = vunpack.c.l.b16 %v1110
    %v1132 = vunpack.c.l.b16 %v1111
    %v1133 = vunpack.c.l.b16 %v1112
    %v1134 = vunpack.c.l.b16 %v1113
    %v1135 = vunpack.c.l.b16 %v1114
    %v1136 = vunpack.c.l.b16 %v1115
    %v1137 = vpack.c.b16 %v1130, %v1129
    %v1138 = vpack.c.b16 %v1132, %v1131
    %v1139 = vpack.c.b16 %v1134, %v1133
    %v1140 = vpack.c.b16 %v1136, %v1135
    %v1146 = vsel %vm223, %v1106, 0
    %1148 = vmatprep.subr.bf16.mxu0 0
    %1149 = vmatpush1.bf16.msra.mxu0 0
    %1150 = vmatprep.subr.bf16.mxu0 0
    %1151 = vmatpush1.bf16.msra.mxu0 0
    %1152 = vmatprep.subr.bf16.mxu0 0
    %1153 = vmatpush1.bf16.msra.mxu0 0
    %1154 = vmatprep.subr.bf16.mxu0 0
    %1155 = vmatpush1.bf16.msra.mxu0 0
    %1156 = vmatprep.subr.bf16.mxu0 0
    %1157 = vmatpush1.bf16.msra.mxu0 %v1140
    %1158 = vmatprep.subr.bf16.mxu0 0
    %1159 = vmatpush1.bf16.msra.mxu0 %v1139
    %1160 = vmatprep.subr.bf16.mxu0 0
    %1161 = vmatpush1.bf16.msra.mxu0 %v1138
    %1162 = vmatprep.subr.bf16.mxu0 0
    %1163 = vmatpush1.bf16.msra.mxu0 %v1137
    %1164 = vmatprep.subr.bf16.mxu0 0
    %1165 = vmatpush2.bf16.msra.mxu0 0
    %1166 = vmatprep.subr.bf16.mxu0 0
    %1167 = vmatpush2.bf16.msra.mxu0 0
    %1168 = vmatprep.subr.bf16.mxu0 0
    %1169 = vmatpush2.bf16.msra.mxu0 0
    %1170 = vmatprep.subr.bf16.mxu0 0
    %1171 = vmatpush2.bf16.msra.mxu0 0
    %1172 = vmatprep.subr.bf16.mxu0 0
    %1173 = vmatpush2.bf16.msra.mxu0 0
    %1174 = vmatprep.subr.bf16.mxu0 0
    %1175 = vmatpush2.bf16.msra.mxu0 0
    %1176 = vmatprep.subr.bf16.mxu0 0
    %1177 = vmatpush2.bf16.msra.mxu0 0
    %1178 = vmatprep.subr.bf16.mxu0 0
    %1179 = vmatpush2.bf16.msra.mxu0 0
    %1180 = vmatprep.mubr.bf16.mxu0 0
    %1181 = vmatmul.mubr.bf16.gmra.mxu0 %v1146
    %v1182 = vpop.f32.mrf.mxu0
    %v1183 = vadd.f32 %v1120, %v1182
    %v1184 = vpop.f32.mrf.mxu0
    %v1185 = vpop.f32.mrf.mxu0
    %v1186 = vpop.f32.mrf.mxu0
    %1187 = vdwg.mxu0
    %v1188 = vmax.f32 %v1183, 0.0
    %v1189 = vpack.c.bf16 %v1188, %v1188
    %s1190 = scalar_lea.vmem %s3, 64
    %v1191 = vld [vmem:[%s1190] sm:$0xf]
    %v1192 = vld [vmem:[%s1190 + $0x4] sm:$0xf]
    %v1193 = vld [vmem:[%s1190 + $0x8] sm:$0xf]
    %v1194 = vld [vmem:[%s1190 + $0xc] sm:$0xf]
    %v1195 = vld [vmem:[%s1190 + $0x10] sm:$0xf]
    %v1196 = vld [vmem:[%s1190 + $0x14] sm:$0xf]
    %v1197 = vld [vmem:[%s1190 + $0x18] sm:$0xf]
    %v1198 = vld [vmem:[%s1190 + $0x1c] sm:$0xf]
    %v1199 = vld [vmem:[%s4 + $0x6] sm:$0x1]
    %v1200 = vlaneseq
    %v1201 = vshrl.u32 %v1200, 7
    %v1202 = vsub.s32 0, %v1201
    %v1203 = vrot.slane %v1199, %v1202
    %v1212 = vunpack.c.l.b16 %v1191
    %v1213 = vunpack.c.l.b16 %v1192
    %v1214 = vunpack.c.l.b16 %v1193
    %v1215 = vunpack.c.l.b16 %v1194
    %v1216 = vunpack.c.l.b16 %v1195
    %v1217 = vunpack.c.l.b16 %v1196
    %v1218 = vunpack.c.l.b16 %v1197
    %v1219 = vunpack.c.l.b16 %v1198
    %v1220 = vpack.c.b16 %v1213, %v1212
    %v1221 = vpack.c.b16 %v1215, %v1214
    %v1222 = vpack.c.b16 %v1217, %v1216
    %v1223 = vpack.c.b16 %v1219, %v1218
    %v1229 = vsel %vm223, %v1189, 0
    %1231 = vmatprep.subr.bf16.mxu0 0
    %1232 = vmatpush1.bf16.msra.mxu0 0
    %1233 = vmatprep.subr.bf16.mxu0 0
    %1234 = vmatpush1.bf16.msra.mxu0 0
    %1235 = vmatprep.subr.bf16.mxu0 0
    %1236 = vmatpush1.bf16.msra.mxu0 0
    %1237 = vmatprep.subr.bf16.mxu0 0
    %1238 = vmatpush1.bf16.msra.mxu0 0
    %1239 = vmatprep.subr.bf16.mxu0 0
    %1240 = vmatpush1.bf16.msra.mxu0 %v1223
    %1241 = vmatprep.subr.bf16.mxu0 0
    %1242 = vmatpush1.bf16.msra.mxu0 %v1222
    %1243 = vmatprep.subr.bf16.mxu0 0
    %1244 = vmatpush1.bf16.msra.mxu0 %v1221
    %1245 = vmatprep.subr.bf16.mxu0 0
    %1246 = vmatpush1.bf16.msra.mxu0 %v1220
    %1247 = vmatprep.subr.bf16.mxu0 0
    %1248 = vmatpush2.bf16.msra.mxu0 0
    %1249 = vmatprep.subr.bf16.mxu0 0
    %1250 = vmatpush2.bf16.msra.mxu0 0
    %1251 = vmatprep.subr.bf16.mxu0 0
    %1252 = vmatpush2.bf16.msra.mxu0 0
    %1253 = vmatprep.subr.bf16.mxu0 0
    %1254 = vmatpush2.bf16.msra.mxu0 0
    %1255 = vmatprep.subr.bf16.mxu0 0
    %1256 = vmatpush2.bf16.msra.mxu0 0
    %1257 = vmatprep.subr.bf16.mxu0 0
    %1258 = vmatpush2.bf16.msra.mxu0 0
    %1259 = vmatprep.subr.bf16.mxu0 0
    %1260 = vmatpush2.bf16.msra.mxu0 0
    %1261 = vmatprep.subr.bf16.mxu0 0
    %1262 = vmatpush2.bf16.msra.mxu0 0
    %1263 = vmatprep.mubr.bf16.mxu0 0
    %1264 = vmatmul.mubr.bf16.gmra.mxu0 %v1229
    %v1265 = vpop.f32.mrf.mxu0
    %v1266 = vadd.f32 %v1203, %v1265
    %v1267 = vpop.f32.mrf.mxu0
    %v1268 = vpop.f32.mrf.mxu0
    %v1269 = vpop.f32.mrf.mxu0
    %1270 = vdwg.mxu0
    %v1271 = vmax.f32 %v1266, 0.0
    %v1272 = vpack.c.bf16 %v1271, %v1271
    %s1273 = scalar_lea.vmem %s3, 96
    %v1274 = vld [vmem:[%s1273] sm:$0xf]
    %v1275 = vld [vmem:[%s1273 + $0x4] sm:$0xf]
    %v1276 = vld [vmem:[%s1273 + $0x8] sm:$0xf]
    %v1277 = vld [vmem:[%s1273 + $0xc] sm:$0xf]
    %v1278 = vld [vmem:[%s1273 + $0x10] sm:$0xf]
    %v1279 = vld [vmem:[%s1273 + $0x14] sm:$0xf]
    %v1280 = vld [vmem:[%s1273 + $0x18] sm:$0xf]
    %v1281 = vld [vmem:[%s1273 + $0x1c] sm:$0xf]
    %v1282 = vld [vmem:[%s4 + $0x7] sm:$0x1]
    %v1283 = vlaneseq
    %v1284 = vshrl.u32 %v1283, 7
    %v1285 = vsub.s32 0, %v1284
    %v1286 = vrot.slane %v1282, %v1285
    %v1295 = vunpack.c.l.b16 %v1274
    %v1296 = vunpack.c.l.b16 %v1275
    %v1297 = vunpack.c.l.b16 %v1276
    %v1298 = vunpack.c.l.b16 %v1277
    %v1299 = vunpack.c.l.b16 %v1278
    %v1300 = vunpack.c.l.b16 %v1279
    %v1301 = vunpack.c.l.b16 %v1280
    %v1302 = vunpack.c.l.b16 %v1281
    %v1303 = vpack.c.b16 %v1296, %v1295
    %v1304 = vpack.c.b16 %v1298, %v1297
    %v1305 = vpack.c.b16 %v1300, %v1299
    %v1306 = vpack.c.b16 %v1302, %v1301
    %v1312 = vsel %vm223, %v1272, 0
    %1314 = vmatprep.subr.bf16.mxu0 0
    %1315 = vmatpush1.bf16.msra.mxu0 0
    %1316 = vmatprep.subr.bf16.mxu0 0
    %1317 = vmatpush1.bf16.msra.mxu0 0
    %1318 = vmatprep.subr.bf16.mxu0 0
    %1319 = vmatpush1.bf16.msra.mxu0 0
    %1320 = vmatprep.subr.bf16.mxu0 0
    %1321 = vmatpush1.bf16.msra.mxu0 0
    %1322 = vmatprep.subr.bf16.mxu0 0
    %1323 = vmatpush1.bf16.msra.mxu0 %v1306
    %1324 = vmatprep.subr.bf16.mxu0 0
    %1325 = vmatpush1.bf16.msra.mxu0 %v1305
    %1326 = vmatprep.subr.bf16.mxu0 0
    %1327 = vmatpush1.bf16.msra.mxu0 %v1304
    %1328 = vmatprep.subr.bf16.mxu0 0
    %1329 = vmatpush1.bf16.msra.mxu0 %v1303
    %1330 = vmatprep.subr.bf16.mxu0 0
    %1331 = vmatpush2.bf16.msra.mxu0 0
    %1332 = vmatprep.subr.bf16.mxu0 0
    %1333 = vmatpush2.bf16.msra.mxu0 0
    %1334 = vmatprep.subr.bf16.mxu0 0
    %1335 = vmatpush2.bf16.msra.mxu0 0
    %1336 = vmatprep.subr.bf16.mxu0 0
    %1337 = vmatpush2.bf16.msra.mxu0 0
    %1338 = vmatprep.subr.bf16.mxu0 0
    %1339 = vmatpush2.bf16.msra.mxu0 0
    %1340 = vmatprep.subr.bf16.mxu0 0
    %1341 = vmatpush2.bf16.msra.mxu0 0
    %1342 = vmatprep.subr.bf16.mxu0 0
    %1343 = vmatpush2.bf16.msra.mxu0 0
    %1344 = vmatprep.subr.bf16.mxu0 0
    %1345 = vmatpush2.bf16.msra.mxu0 0
    %1346 = vmatprep.mubr.bf16.mxu0 0
    %1347 = vmatmul.mubr.bf16.gmra.mxu0 %v1312
    %v1348 = vpop.f32.mrf.mxu0
    %v1349 = vadd.f32 %v1286, %v1348
    %v1350 = vpop.f32.mrf.mxu0
    %v1351 = vpop.f32.mrf.mxu0
    %v1352 = vpop.f32.mrf.mxu0
    %1353 = vdwg.mxu0
    %v1354 = vmax.f32 %v1349, 0.0
    %v1355 = vpack.c.bf16 %v1354, %v1354
    %v1356 = vld [vmem:[%s1] sm:$0xff]
    %v1357 = vpack.c.bf16 %v1356, %v1356
    %vm1358 = vcmask 64512
    %v1360 = vsel %vm1358, %v1357, 0
    %vm1362 = vcmask 1043456
    %v1364 = vsel %vm1362, %v1355, 0
    %1366 = vmatprep.subr.bf16.mxu0 0
    %1367 = vmatpush1.bf16.msra.mxu0 0
    %1368 = vmatprep.subr.bf16.mxu0 0
    %1369 = vmatpush1.bf16.msra.mxu0 0
    %1370 = vmatprep.subr.bf16.mxu0 0
    %1371 = vmatpush1.bf16.msra.mxu0 0
    %1372 = vmatprep.subr.bf16.mxu0 0
    %1373 = vmatpush1.bf16.msra.mxu0 0
    %1374 = vmatprep.subr.bf16.mxu0 0
    %1375 = vmatpush1.bf16.msra.mxu0 0
    %1376 = vmatprep.subr.bf16.mxu0 0
    %1377 = vmatpush1.bf16.msra.mxu0 0
    %1378 = vmatprep.subr.bf16.mxu0 0
    %1379 = vmatpush1.bf16.msra.mxu0 0
    %1380 = vmatprep.subr.bf16.mxu0 0
    %1381 = vmatpush1.bf16.msra.mxu0 %v1364
    %1382 = vmatprep.subr.bf16.mxu0 0
    %1383 = vmatpush2.bf16.msra.mxu0 0
    %1384 = vmatprep.subr.bf16.mxu0 0
    %1385 = vmatpush2.bf16.msra.mxu0 0
    %1386 = vmatprep.subr.bf16.mxu0 0
    %1387 = vmatpush2.bf16.msra.mxu0 0
    %1388 = vmatprep.subr.bf16.mxu0 0
    %1389 = vmatpush2.bf16.msra.mxu0 0
    %1390 = vmatprep.subr.bf16.mxu0 0
    %1391 = vmatpush2.bf16.msra.mxu0 0
    %1392 = vmatprep.subr.bf16.mxu0 0
    %1393 = vmatpush2.bf16.msra.mxu0 0
    %1394 = vmatprep.subr.bf16.mxu0 0
    %1395 = vmatpush2.bf16.msra.mxu0 0
    %1396 = vmatprep.subr.bf16.mxu0 0
    %1397 = vmatpush2.bf16.msra.mxu0 0
    %1398 = vmatprep.mubr.bf16.mxu0 0
    %1399 = vmatmul.mubr.bf16.gmra.mxu0 %v1360
    %v1400 = vpop.f32.mrf.mxu0
    %v1401 = vadd.f32 0.0, %v1400
    %v1402 = vpop.f32.mrf.mxu0
    %v1403 = vpop.f32.mrf.mxu0
    %v1404 = vpop.f32.mrf.mxu0
    %1405 = vdwg.mxu0
    %v1406 = vpack.c.bf16 %v1401, %v1401
    %v1407 = vld [vmem:[%s5] sm:$0xf]
    %v1408 = vld [vmem:[%s5 + $0x4] sm:$0xf]
    %v1409 = vld [vmem:[%s5 + $0x8] sm:$0xf]
    %v1410 = vld [vmem:[%s5 + $0xc] sm:$0xf]
    %v1411 = vld [vmem:[%s5 + $0x10] sm:$0xf]
    %v1412 = vld [vmem:[%s5 + $0x14] sm:$0xf]
    %v1413 = vld [vmem:[%s5 + $0x18] sm:$0xf]
    %v1414 = vld [vmem:[%s5 + $0x1c] sm:$0xf]
    %v1415 = vld [vmem:[%s6] sm:$0x1]
    %v1416 = vlaneseq
    %v1417 = vshrl.u32 %v1416, 7
    %v1418 = vsub.s32 0, %v1417
    %v1419 = vrot.slane %v1415, %v1418
    %v1428 = vunpack.c.l.b16 %v1407
    %v1429 = vunpack.c.l.b16 %v1408
    %v1430 = vunpack.c.l.b16 %v1409
    %v1431 = vunpack.c.l.b16 %v1410
    %v1432 = vunpack.c.l.b16 %v1411
    %v1433 = vunpack.c.l.b16 %v1412
    %v1434 = vunpack.c.l.b16 %v1413
    %v1435 = vunpack.c.l.b16 %v1414
    %v1436 = vpack.c.b16 %v1429, %v1428
    %v1437 = vpack.c.b16 %v1431, %v1430
    %v1438 = vpack.c.b16 %v1433, %v1432
    %v1439 = vpack.c.b16 %v1435, %v1434
    %v1445 = vsel %vm223, %v1406, 0
    %1447 = vmatprep.subr.bf16.mxu0 0
    %1448 = vmatpush1.bf16.msra.mxu0 0
    %1449 = vmatprep.subr.bf16.mxu0 0
    %1450 = vmatpush1.bf16.msra.mxu0 0
    %1451 = vmatprep.subr.bf16.mxu0 0
    %1452 = vmatpush1.bf16.msra.mxu0 0
    %1453 = vmatprep.subr.bf16.mxu0 0
    %1454 = vmatpush1.bf16.msra.mxu0 0
    %1455 = vmatprep.subr.bf16.mxu0 0
    %1456 = vmatpush1.bf16.msra.mxu0 %v1439
    %1457 = vmatprep.subr.bf16.mxu0 0
    %1458 = vmatpush1.bf16.msra.mxu0 %v1438
    %1459 = vmatprep.subr.bf16.mxu0 0
    %1460 = vmatpush1.bf16.msra.mxu0 %v1437
    %1461 = vmatprep.subr.bf16.mxu0 0
    %1462 = vmatpush1.bf16.msra.mxu0 %v1436
    %1463 = vmatprep.subr.bf16.mxu0 0
    %1464 = vmatpush2.bf16.msra.mxu0 0
    %1465 = vmatprep.subr.bf16.mxu0 0
    %1466 = vmatpush2.bf16.msra.mxu0 0
    %1467 = vmatprep.subr.bf16.mxu0 0
    %1468 = vmatpush2.bf16.msra.mxu0 0
    %1469 = vmatprep.subr.bf16.mxu0 0
    %1470 = vmatpush2.bf16.msra.mxu0 0
    %1471 = vmatprep.subr.bf16.mxu0 0
    %1472 = vmatpush2.bf16.msra.mxu0 0
    %1473 = vmatprep.subr.bf16.mxu0 0
    %1474 = vmatpush2.bf16.msra.mxu0 0
    %1475 = vmatprep.subr.bf16.mxu0 0
    %1476 = vmatpush2.bf16.msra.mxu0 0
    %1477 = vmatprep.subr.bf16.mxu0 0
    %1478 = vmatpush2.bf16.msra.mxu0 0
    %1479 = vmatprep.mubr.bf16.mxu0 0
    %1480 = vmatmul.mubr.bf16.gmra.mxu0 %v1445
    %v1481 = vpop.f32.mrf.mxu0
    %v1482 = vadd.f32 %v1419, %v1481
    %v1483 = vpop.f32.mrf.mxu0
    %v1484 = vpop.f32.mrf.mxu0
    %v1485 = vpop.f32.mrf.mxu0
    %1486 = vdwg.mxu0
    %v1487 = vpack.c.bf16 %v1482, %v1482
    %v1489 = vsel %vm1362, %v1487, 0
    %1491 = vmatprep.subr.bf16.mxu0 0
    %1492 = vmatpush1.bf16.msra.mxu0 0
    %1493 = vmatprep.subr.bf16.mxu0 0
    %1494 = vmatpush1.bf16.msra.mxu0 0
    %1495 = vmatprep.subr.bf16.mxu0 0
    %1496 = vmatpush1.bf16.msra.mxu0 0
    %1497 = vmatprep.subr.bf16.mxu0 0
    %1498 = vmatpush1.bf16.msra.mxu0 0
    %1499 = vmatprep.subr.bf16.mxu0 0
    %1500 = vmatpush1.bf16.msra.mxu0 0
    %1501 = vmatprep.subr.bf16.mxu0 0
    %1502 = vmatpush1.bf16.msra.mxu0 0
    %1503 = vmatprep.subr.bf16.mxu0 0
    %1504 = vmatpush1.bf16.msra.mxu0 0
    %1505 = vmatprep.subr.bf16.mxu0 0
    %1506 = vmatpush1.bf16.msra.mxu0 %v1489
    %1507 = vmatprep.subr.bf16.mxu0 0
    %1508 = vmatpush2.bf16.msra.mxu0 0
    %1509 = vmatprep.subr.bf16.mxu0 0
    %1510 = vmatpush2.bf16.msra.mxu0 0
    %1511 = vmatprep.subr.bf16.mxu0 0
    %1512 = vmatpush2.bf16.msra.mxu0 0
    %1513 = vmatprep.subr.bf16.mxu0 0
    %1514 = vmatpush2.bf16.msra.mxu0 0
    %1515 = vmatprep.subr.bf16.mxu0 0
    %1516 = vmatpush2.bf16.msra.mxu0 0
    %1517 = vmatprep.subr.bf16.mxu0 0
    %1518 = vmatpush2.bf16.msra.mxu0 0
    %1519 = vmatprep.subr.bf16.mxu0 0
    %1520 = vmatpush2.bf16.msra.mxu0 0
    %1521 = vmatprep.subr.bf16.mxu0 0
    %1522 = vmatpush2.bf16.msra.mxu0 0
    %1523 = vmatprep.mubr.bf16.mxu0 0
    %1524 = vmatmul.mubr.bf16.gmra.mxu0 %v1360
    %v1525 = vpop.f32.mrf.mxu0
    %v1526 = vadd.f32 0.0, %v1525
    %v1527 = vpop.f32.mrf.mxu0
    %v1528 = vpop.f32.mrf.mxu0
    %v1529 = vpop.f32.mrf.mxu0
    %1530 = vdwg.mxu0
    %v1531 = vpack.c.bf16 %v1526, %v1526
    %s1532 = scalar_lea.vmem %s5, 32
    %v1533 = vld [vmem:[%s1532] sm:$0xf]
    %v1534 = vld [vmem:[%s1532 + $0x4] sm:$0xf]
    %v1535 = vld [vmem:[%s1532 + $0x8] sm:$0xf]
    %v1536 = vld [vmem:[%s1532 + $0xc] sm:$0xf]
    %v1537 = vld [vmem:[%s1532 + $0x10] sm:$0xf]
    %v1538 = vld [vmem:[%s1532 + $0x14] sm:$0xf]
    %v1539 = vld [vmem:[%s1532 + $0x18] sm:$0xf]
    %v1540 = vld [vmem:[%s1532 + $0x1c] sm:$0xf]
    %v1541 = vld [vmem:[%s6 + $0x1] sm:$0x1]
    %v1542 = vlaneseq
    %v1543 = vshrl.u32 %v1542, 7
    %v1544 = vsub.s32 0, %v1543
    %v1545 = vrot.slane %v1541, %v1544
    %v1554 = vunpack.c.l.b16 %v1533
    %v1555 = vunpack.c.l.b16 %v1534
    %v1556 = vunpack.c.l.b16 %v1535
    %v1557 = vunpack.c.l.b16 %v1536
    %v1558 = vunpack.c.l.b16 %v1537
    %v1559 = vunpack.c.l.b16 %v1538
    %v1560 = vunpack.c.l.b16 %v1539
    %v1561 = vunpack.c.l.b16 %v1540
    %v1562 = vpack.c.b16 %v1555, %v1554
    %v1563 = vpack.c.b16 %v1557, %v1556
    %v1564 = vpack.c.b16 %v1559, %v1558
    %v1565 = vpack.c.b16 %v1561, %v1560
    %v1571 = vsel %vm223, %v1531, 0
    %1573 = vmatprep.subr.bf16.mxu0 0
    %1574 = vmatpush1.bf16.msra.mxu0 0
    %1575 = vmatprep.subr.bf16.mxu0 0
    %1576 = vmatpush1.bf16.msra.mxu0 0
    %1577 = vmatprep.subr.bf16.mxu0 0
    %1578 = vmatpush1.bf16.msra.mxu0 0
    %1579 = vmatprep.subr.bf16.mxu0 0
    %1580 = vmatpush1.bf16.msra.mxu0 0
    %1581 = vmatprep.subr.bf16.mxu0 0
    %1582 = vmatpush1.bf16.msra.mxu0 %v1565
    %1583 = vmatprep.subr.bf16.mxu0 0
    %1584 = vmatpush1.bf16.msra.mxu0 %v1564
    %1585 = vmatprep.subr.bf16.mxu0 0
    %1586 = vmatpush1.bf16.msra.mxu0 %v1563
    %1587 = vmatprep.subr.bf16.mxu0 0
    %1588 = vmatpush1.bf16.msra.mxu0 %v1562
    %1589 = vmatprep.subr.bf16.mxu0 0
    %1590 = vmatpush2.bf16.msra.mxu0 0
    %1591 = vmatprep.subr.bf16.mxu0 0
    %1592 = vmatpush2.bf16.msra.mxu0 0
    %1593 = vmatprep.subr.bf16.mxu0 0
    %1594 = vmatpush2.bf16.msra.mxu0 0
    %1595 = vmatprep.subr.bf16.mxu0 0
    %1596 = vmatpush2.bf16.msra.mxu0 0
    %1597 = vmatprep.subr.bf16.mxu0 0
    %1598 = vmatpush2.bf16.msra.mxu0 0
    %1599 = vmatprep.subr.bf16.mxu0 0
    %1600 = vmatpush2.bf16.msra.mxu0 0
    %1601 = vmatprep.subr.bf16.mxu0 0
    %1602 = vmatpush2.bf16.msra.mxu0 0
    %1603 = vmatprep.subr.bf16.mxu0 0
    %1604 = vmatpush2.bf16.msra.mxu0 0
    %1605 = vmatprep.mubr.bf16.mxu0 0
    %1606 = vmatmul.mubr.bf16.gmra.mxu0 %v1571
    %v1607 = vpop.f32.mrf.mxu0
    %v1608 = vadd.f32 %v1545, %v1607
    %v1609 = vpop.f32.mrf.mxu0
    %v1610 = vpop.f32.mrf.mxu0
    %v1611 = vpop.f32.mrf.mxu0
    %1612 = vdwg.mxu0
    %v1613 = vpack.c.bf16 %v1608, %v1608
    %v1615 = vsel %vm1362, %v1613, 0
    %1617 = vmatprep.subr.bf16.mxu0 0
    %1618 = vmatpush1.bf16.msra.mxu0 0
    %1619 = vmatprep.subr.bf16.mxu0 0
    %1620 = vmatpush1.bf16.msra.mxu0 0
    %1621 = vmatprep.subr.bf16.mxu0 0
    %1622 = vmatpush1.bf16.msra.mxu0 0
    %1623 = vmatprep.subr.bf16.mxu0 0
    %1624 = vmatpush1.bf16.msra.mxu0 0
    %1625 = vmatprep.subr.bf16.mxu0 0
    %1626 = vmatpush1.bf16.msra.mxu0 0
    %1627 = vmatprep.subr.bf16.mxu0 0
    %1628 = vmatpush1.bf16.msra.mxu0 0
    %1629 = vmatprep.subr.bf16.mxu0 0
    %1630 = vmatpush1.bf16.msra.mxu0 0
    %1631 = vmatprep.subr.bf16.mxu0 0
    %1632 = vmatpush1.bf16.msra.mxu0 %v1615
    %1633 = vmatprep.subr.bf16.mxu0 0
    %1634 = vmatpush2.bf16.msra.mxu0 0
    %1635 = vmatprep.subr.bf16.mxu0 0
    %1636 = vmatpush2.bf16.msra.mxu0 0
    %1637 = vmatprep.subr.bf16.mxu0 0
    %1638 = vmatpush2.bf16.msra.mxu0 0
    %1639 = vmatprep.subr.bf16.mxu0 0
    %1640 = vmatpush2.bf16.msra.mxu0 0
    %1641 = vmatprep.subr.bf16.mxu0 0
    %1642 = vmatpush2.bf16.msra.mxu0 0
    %1643 = vmatprep.subr.bf16.mxu0 0
    %1644 = vmatpush2.bf16.msra.mxu0 0
    %1645 = vmatprep.subr.bf16.mxu0 0
    %1646 = vmatpush2.bf16.msra.mxu0 0
    %1647 = vmatprep.subr.bf16.mxu0 0
    %1648 = vmatpush2.bf16.msra.mxu0 0
    %1649 = vmatprep.mubr.bf16.mxu0 0
    %1650 = vmatmul.mubr.bf16.gmra.mxu0 %v1360
    %v1651 = vpop.f32.mrf.mxu0
    %v1652 = vadd.f32 0.0, %v1651
    %v1653 = vpop.f32.mrf.mxu0
    %v1654 = vpop.f32.mrf.mxu0
    %v1655 = vpop.f32.mrf.mxu0
    %1656 = vdwg.mxu0
    %v1657 = vpack.c.bf16 %v1652, %v1652
    %s1658 = scalar_lea.vmem %s5, 64
    %v1659 = vld [vmem:[%s1658] sm:$0xf]
    %v1660 = vld [vmem:[%s1658 + $0x4] sm:$0xf]
    %v1661 = vld [vmem:[%s1658 + $0x8] sm:$0xf]
    %v1662 = vld [vmem:[%s1658 + $0xc] sm:$0xf]
    %v1663 = vld [vmem:[%s1658 + $0x10] sm:$0xf]
    %v1664 = vld [vmem:[%s1658 + $0x14] sm:$0xf]
    %v1665 = vld [vmem:[%s1658 + $0x18] sm:$0xf]
    %v1666 = vld [vmem:[%s1658 + $0x1c] sm:$0xf]
    %v1667 = vld [vmem:[%s6 + $0x2] sm:$0x1]
    %v1668 = vlaneseq
    %v1669 = vshrl.u32 %v1668, 7
    %v1670 = vsub.s32 0, %v1669
    %v1671 = vrot.slane %v1667, %v1670
    %v1680 = vunpack.c.l.b16 %v1659
    %v1681 = vunpack.c.l.b16 %v1660
    %v1682 = vunpack.c.l.b16 %v1661
    %v1683 = vunpack.c.l.b16 %v1662
    %v1684 = vunpack.c.l.b16 %v1663
    %v1685 = vunpack.c.l.b16 %v1664
    %v1686 = vunpack.c.l.b16 %v1665
    %v1687 = vunpack.c.l.b16 %v1666
    %v1688 = vpack.c.b16 %v1681, %v1680
    %v1689 = vpack.c.b16 %v1683, %v1682
    %v1690 = vpack.c.b16 %v1685, %v1684
    %v1691 = vpack.c.b16 %v1687, %v1686
    %v1697 = vsel %vm223, %v1657, 0
    %1699 = vmatprep.subr.bf16.mxu0 0
    %1700 = vmatpush1.bf16.msra.mxu0 0
    %1701 = vmatprep.subr.bf16.mxu0 0
    %1702 = vmatpush1.bf16.msra.mxu0 0
    %1703 = vmatprep.subr.bf16.mxu0 0
    %1704 = vmatpush1.bf16.msra.mxu0 0
    %1705 = vmatprep.subr.bf16.mxu0 0
    %1706 = vmatpush1.bf16.msra.mxu0 0
    %1707 = vmatprep.subr.bf16.mxu0 0
    %1708 = vmatpush1.bf16.msra.mxu0 %v1691
    %1709 = vmatprep.subr.bf16.mxu0 0
    %1710 = vmatpush1.bf16.msra.mxu0 %v1690
    %1711 = vmatprep.subr.bf16.mxu0 0
    %1712 = vmatpush1.bf16.msra.mxu0 %v1689
    %1713 = vmatprep.subr.bf16.mxu0 0
    %1714 = vmatpush1.bf16.msra.mxu0 %v1688
    %1715 = vmatprep.subr.bf16.mxu0 0
    %1716 = vmatpush2.bf16.msra.mxu0 0
    %1717 = vmatprep.subr.bf16.mxu0 0
    %1718 = vmatpush2.bf16.msra.mxu0 0
    %1719 = vmatprep.subr.bf16.mxu0 0
    %1720 = vmatpush2.bf16.msra.mxu0 0
    %1721 = vmatprep.subr.bf16.mxu0 0
    %1722 = vmatpush2.bf16.msra.mxu0 0
    %1723 = vmatprep.subr.bf16.mxu0 0
    %1724 = vmatpush2.bf16.msra.mxu0 0
    %1725 = vmatprep.subr.bf16.mxu0 0
    %1726 = vmatpush2.bf16.msra.mxu0 0
    %1727 = vmatprep.subr.bf16.mxu0 0
    %1728 = vmatpush2.bf16.msra.mxu0 0
    %1729 = vmatprep.subr.bf16.mxu0 0
    %1730 = vmatpush2.bf16.msra.mxu0 0
    %1731 = vmatprep.mubr.bf16.mxu0 0
    %1732 = vmatmul.mubr.bf16.gmra.mxu0 %v1697
    %v1733 = vpop.f32.mrf.mxu0
    %v1734 = vadd.f32 %v1671, %v1733
    %v1735 = vpop.f32.mrf.mxu0
    %v1736 = vpop.f32.mrf.mxu0
    %v1737 = vpop.f32.mrf.mxu0
    %1738 = vdwg.mxu0
    %v1739 = vpack.c.bf16 %v1734, %v1734
    %v1741 = vsel %vm1362, %v1739, 0
    %1743 = vmatprep.subr.bf16.mxu0 0
    %1744 = vmatpush1.bf16.msra.mxu0 0
    %1745 = vmatprep.subr.bf16.mxu0 0
    %1746 = vmatpush1.bf16.msra.mxu0 0
    %1747 = vmatprep.subr.bf16.mxu0 0
    %1748 = vmatpush1.bf16.msra.mxu0 0
    %1749 = vmatprep.subr.bf16.mxu0 0
    %1750 = vmatpush1.bf16.msra.mxu0 0
    %1751 = vmatprep.subr.bf16.mxu0 0
    %1752 = vmatpush1.bf16.msra.mxu0 0
    %1753 = vmatprep.subr.bf16.mxu0 0
    %1754 = vmatpush1.bf16.msra.mxu0 0
    %1755 = vmatprep.subr.bf16.mxu0 0
    %1756 = vmatpush1.bf16.msra.mxu0 0
    %1757 = vmatprep.subr.bf16.mxu0 0
    %1758 = vmatpush1.bf16.msra.mxu0 %v1741
    %1759 = vmatprep.subr.bf16.mxu0 0
    %1760 = vmatpush2.bf16.msra.mxu0 0
    %1761 = vmatprep.subr.bf16.mxu0 0
    %1762 = vmatpush2.bf16.msra.mxu0 0
    %1763 = vmatprep.subr.bf16.mxu0 0
    %1764 = vmatpush2.bf16.msra.mxu0 0
    %1765 = vmatprep.subr.bf16.mxu0 0
    %1766 = vmatpush2.bf16.msra.mxu0 0
    %1767 = vmatprep.subr.bf16.mxu0 0
    %1768 = vmatpush2.bf16.msra.mxu0 0
    %1769 = vmatprep.subr.bf16.mxu0 0
    %1770 = vmatpush2.bf16.msra.mxu0 0
    %1771 = vmatprep.subr.bf16.mxu0 0
    %1772 = vmatpush2.bf16.msra.mxu0 0
    %1773 = vmatprep.subr.bf16.mxu0 0
    %1774 = vmatpush2.bf16.msra.mxu0 0
    %1775 = vmatprep.mubr.bf16.mxu0 0
    %1776 = vmatmul.mubr.bf16.gmra.mxu0 %v1360
    %v1777 = vpop.f32.mrf.mxu0
    %v1778 = vadd.f32 0.0, %v1777
    %v1779 = vpop.f32.mrf.mxu0
    %v1780 = vpop.f32.mrf.mxu0
    %v1781 = vpop.f32.mrf.mxu0
    %1782 = vdwg.mxu0
    %v1783 = vpack.c.bf16 %v1778, %v1778
    %s1784 = scalar_lea.vmem %s5, 96
    %v1785 = vld [vmem:[%s1784] sm:$0xf]
    %v1786 = vld [vmem:[%s1784 + $0x4] sm:$0xf]
    %v1787 = vld [vmem:[%s1784 + $0x8] sm:$0xf]
    %v1788 = vld [vmem:[%s1784 + $0xc] sm:$0xf]
    %v1789 = vld [vmem:[%s1784 + $0x10] sm:$0xf]
    %v1790 = vld [vmem:[%s1784 + $0x14] sm:$0xf]
    %v1791 = vld [vmem:[%s1784 + $0x18] sm:$0xf]
    %v1792 = vld [vmem:[%s1784 + $0x1c] sm:$0xf]
    %v1793 = vld [vmem:[%s6 + $0x3] sm:$0x1]
    %v1794 = vlaneseq
    %v1795 = vshrl.u32 %v1794, 7
    %v1796 = vsub.s32 0, %v1795
    %v1797 = vrot.slane %v1793, %v1796
    %v1806 = vunpack.c.l.b16 %v1785
    %v1807 = vunpack.c.l.b16 %v1786
    %v1808 = vunpack.c.l.b16 %v1787
    %v1809 = vunpack.c.l.b16 %v1788
    %v1810 = vunpack.c.l.b16 %v1789
    %v1811 = vunpack.c.l.b16 %v1790
    %v1812 = vunpack.c.l.b16 %v1791
    %v1813 = vunpack.c.l.b16 %v1792
    %v1814 = vpack.c.b16 %v1807, %v1806
    %v1815 = vpack.c.b16 %v1809, %v1808
    %v1816 = vpack.c.b16 %v1811, %v1810
    %v1817 = vpack.c.b16 %v1813, %v1812
    %v1823 = vsel %vm223, %v1783, 0
    %1825 = vmatprep.subr.bf16.mxu0 0
    %1826 = vmatpush1.bf16.msra.mxu0 0
    %1827 = vmatprep.subr.bf16.mxu0 0
    %1828 = vmatpush1.bf16.msra.mxu0 0
    %1829 = vmatprep.subr.bf16.mxu0 0
    %1830 = vmatpush1.bf16.msra.mxu0 0
    %1831 = vmatprep.subr.bf16.mxu0 0
    %1832 = vmatpush1.bf16.msra.mxu0 0
    %1833 = vmatprep.subr.bf16.mxu0 0
    %1834 = vmatpush1.bf16.msra.mxu0 %v1817
    %1835 = vmatprep.subr.bf16.mxu0 0
    %1836 = vmatpush1.bf16.msra.mxu0 %v1816
    %1837 = vmatprep.subr.bf16.mxu0 0
    %1838 = vmatpush1.bf16.msra.mxu0 %v1815
    %1839 = vmatprep.subr.bf16.mxu0 0
    %1840 = vmatpush1.bf16.msra.mxu0 %v1814
    %1841 = vmatprep.subr.bf16.mxu0 0
    %1842 = vmatpush2.bf16.msra.mxu0 0
    %1843 = vmatprep.subr.bf16.mxu0 0
    %1844 = vmatpush2.bf16.msra.mxu0 0
    %1845 = vmatprep.subr.bf16.mxu0 0
    %1846 = vmatpush2.bf16.msra.mxu0 0
    %1847 = vmatprep.subr.bf16.mxu0 0
    %1848 = vmatpush2.bf16.msra.mxu0 0
    %1849 = vmatprep.subr.bf16.mxu0 0
    %1850 = vmatpush2.bf16.msra.mxu0 0
    %1851 = vmatprep.subr.bf16.mxu0 0
    %1852 = vmatpush2.bf16.msra.mxu0 0
    %1853 = vmatprep.subr.bf16.mxu0 0
    %1854 = vmatpush2.bf16.msra.mxu0 0
    %1855 = vmatprep.subr.bf16.mxu0 0
    %1856 = vmatpush2.bf16.msra.mxu0 0
    %1857 = vmatprep.mubr.bf16.mxu0 0
    %1858 = vmatmul.mubr.bf16.gmra.mxu0 %v1823
    %v1859 = vpop.f32.mrf.mxu0
    %v1860 = vadd.f32 %v1797, %v1859
    %v1861 = vpop.f32.mrf.mxu0
    %v1862 = vpop.f32.mrf.mxu0
    %v1863 = vpop.f32.mrf.mxu0
    %1864 = vdwg.mxu0
    %v1865 = vpack.c.bf16 %v1860, %v1860
    %v1867 = vsel %vm1362, %v1865, 0
    %1869 = vmatprep.subr.bf16.mxu0 0
    %1870 = vmatpush1.bf16.msra.mxu0 0
    %1871 = vmatprep.subr.bf16.mxu0 0
    %1872 = vmatpush1.bf16.msra.mxu0 0
    %1873 = vmatprep.subr.bf16.mxu0 0
    %1874 = vmatpush1.bf16.msra.mxu0 0
    %1875 = vmatprep.subr.bf16.mxu0 0
    %1876 = vmatpush1.bf16.msra.mxu0 0
    %1877 = vmatprep.subr.bf16.mxu0 0
    %1878 = vmatpush1.bf16.msra.mxu0 0
    %1879 = vmatprep.subr.bf16.mxu0 0
    %1880 = vmatpush1.bf16.msra.mxu0 0
    %1881 = vmatprep.subr.bf16.mxu0 0
    %1882 = vmatpush1.bf16.msra.mxu0 0
    %1883 = vmatprep.subr.bf16.mxu0 0
    %1884 = vmatpush1.bf16.msra.mxu0 %v1867
    %1885 = vmatprep.subr.bf16.mxu0 0
    %1886 = vmatpush2.bf16.msra.mxu0 0
    %1887 = vmatprep.subr.bf16.mxu0 0
    %1888 = vmatpush2.bf16.msra.mxu0 0
    %1889 = vmatprep.subr.bf16.mxu0 0
    %1890 = vmatpush2.bf16.msra.mxu0 0
    %1891 = vmatprep.subr.bf16.mxu0 0
    %1892 = vmatpush2.bf16.msra.mxu0 0
    %1893 = vmatprep.subr.bf16.mxu0 0
    %1894 = vmatpush2.bf16.msra.mxu0 0
    %1895 = vmatprep.subr.bf16.mxu0 0
    %1896 = vmatpush2.bf16.msra.mxu0 0
    %1897 = vmatprep.subr.bf16.mxu0 0
    %1898 = vmatpush2.bf16.msra.mxu0 0
    %1899 = vmatprep.subr.bf16.mxu0 0
    %1900 = vmatpush2.bf16.msra.mxu0 0
    %1901 = vmatprep.mubr.bf16.mxu0 0
    %1902 = vmatmul.mubr.bf16.gmra.mxu0 %v1360
    %v1903 = vpop.f32.mrf.mxu0
    %v1904 = vadd.f32 0.0, %v1903
    %v1905 = vpop.f32.mrf.mxu0
    %v1906 = vpop.f32.mrf.mxu0
    %v1907 = vpop.f32.mrf.mxu0
    %1908 = vdwg.mxu0
    %v1909 = vpack.c.bf16 %v1904, %v1904
    %s1910 = scalar_lea.vmem %s5, 128
    %v1911 = vld [vmem:[%s1910] sm:$0xf]
    %v1912 = vld [vmem:[%s1910 + $0x4] sm:$0xf]
    %v1913 = vld [vmem:[%s1910 + $0x8] sm:$0xf]
    %v1914 = vld [vmem:[%s1910 + $0xc] sm:$0xf]
    %v1915 = vld [vmem:[%s1910 + $0x10] sm:$0xf]
    %v1916 = vld [vmem:[%s1910 + $0x14] sm:$0xf]
    %v1917 = vld [vmem:[%s1910 + $0x18] sm:$0xf]
    %v1918 = vld [vmem:[%s1910 + $0x1c] sm:$0xf]
    %v1919 = vld [vmem:[%s6 + $0x4] sm:$0x1]
    %v1920 = vlaneseq
    %v1921 = vshrl.u32 %v1920, 7
    %v1922 = vsub.s32 0, %v1921
    %v1923 = vrot.slane %v1919, %v1922
    %v1932 = vunpack.c.l.b16 %v1911
    %v1933 = vunpack.c.l.b16 %v1912
    %v1934 = vunpack.c.l.b16 %v1913
    %v1935 = vunpack.c.l.b16 %v1914
    %v1936 = vunpack.c.l.b16 %v1915
    %v1937 = vunpack.c.l.b16 %v1916
    %v1938 = vunpack.c.l.b16 %v1917
    %v1939 = vunpack.c.l.b16 %v1918
    %v1940 = vpack.c.b16 %v1933, %v1932
    %v1941 = vpack.c.b16 %v1935, %v1934
    %v1942 = vpack.c.b16 %v1937, %v1936
    %v1943 = vpack.c.b16 %v1939, %v1938
    %v1949 = vsel %vm223, %v1909, 0
    %1951 = vmatprep.subr.bf16.mxu0 0
    %1952 = vmatpush1.bf16.msra.mxu0 0
    %1953 = vmatprep.subr.bf16.mxu0 0
    %1954 = vmatpush1.bf16.msra.mxu0 0
    %1955 = vmatprep.subr.bf16.mxu0 0
    %1956 = vmatpush1.bf16.msra.mxu0 0
    %1957 = vmatprep.subr.bf16.mxu0 0
    %1958 = vmatpush1.bf16.msra.mxu0 0
    %1959 = vmatprep.subr.bf16.mxu0 0
    %1960 = vmatpush1.bf16.msra.mxu0 %v1943
    %1961 = vmatprep.subr.bf16.mxu0 0
    %1962 = vmatpush1.bf16.msra.mxu0 %v1942
    %1963 = vmatprep.subr.bf16.mxu0 0
    %1964 = vmatpush1.bf16.msra.mxu0 %v1941
    %1965 = vmatprep.subr.bf16.mxu0 0
    %1966 = vmatpush1.bf16.msra.mxu0 %v1940
    %1967 = vmatprep.subr.bf16.mxu0 0
    %1968 = vmatpush2.bf16.msra.mxu0 0
    %1969 = vmatprep.subr.bf16.mxu0 0
    %1970 = vmatpush2.bf16.msra.mxu0 0
    %1971 = vmatprep.subr.bf16.mxu0 0
    %1972 = vmatpush2.bf16.msra.mxu0 0
    %1973 = vmatprep.subr.bf16.mxu0 0
    %1974 = vmatpush2.bf16.msra.mxu0 0
    %1975 = vmatprep.subr.bf16.mxu0 0
    %1976 = vmatpush2.bf16.msra.mxu0 0
    %1977 = vmatprep.subr.bf16.mxu0 0
    %1978 = vmatpush2.bf16.msra.mxu0 0
    %1979 = vmatprep.subr.bf16.mxu0 0
    %1980 = vmatpush2.bf16.msra.mxu0 0
    %1981 = vmatprep.subr.bf16.mxu0 0
    %1982 = vmatpush2.bf16.msra.mxu0 0
    %1983 = vmatprep.mubr.bf16.mxu0 0
    %1984 = vmatmul.mubr.bf16.gmra.mxu0 %v1949
    %v1985 = vpop.f32.mrf.mxu0
    %v1986 = vadd.f32 %v1923, %v1985
    %v1987 = vpop.f32.mrf.mxu0
    %v1988 = vpop.f32.mrf.mxu0
    %v1989 = vpop.f32.mrf.mxu0
    %1990 = vdwg.mxu0
    %v1991 = vsel %vm223, %v1986, 0.0
    %v1992 = vrot.slane %v1991, 4
    %v1993 = vadd.f32 %v1991, %v1992
    %v1994 = vrot.slane %v1993, 2
    %v1995 = vadd.f32 %v1993, %v1994
    %v1996 = vrot.slane %v1995, 1
    %v1997 = vadd.f32 %v1995, %v1996
    %v1998 = vmul.f32 %v1997, 0.125
    %v1999 = vsel %vm223, %v1998, 0.0
    %v2000 = vpack.c.bf16 %v1999, %v1999
    %v2001 = vld [vmem:[%s7] sm:$0xf]
    %v2002 = vld [vmem:[%s7 + $0x4] sm:$0xf]
    %v2003 = vld [vmem:[%s7 + $0x8] sm:$0xf]
    %v2004 = vld [vmem:[%s7 + $0xc] sm:$0xf]
    %v2005 = vld [vmem:[%s7 + $0x10] sm:$0xf]
    %v2006 = vld [vmem:[%s7 + $0x14] sm:$0xf]
    %v2007 = vld [vmem:[%s7 + $0x18] sm:$0xf]
    %v2008 = vld [vmem:[%s7 + $0x1c] sm:$0xf]
    %v2009 = vld [vmem:[%s7 + $0x20] sm:$0xf]
    %v2010 = vld [vmem:[%s7 + $0x24] sm:$0xf]
    %v2011 = vld [vmem:[%s7 + $0x28] sm:$0xf]
    %v2012 = vld [vmem:[%s7 + $0x2c] sm:$0xf]
    %v2013 = vld [vmem:[%s7 + $0x30] sm:$0xf]
    %v2014 = vld [vmem:[%s7 + $0x34] sm:$0xf]
    %v2015 = vld [vmem:[%s7 + $0x38] sm:$0xf]
    %v2016 = vld [vmem:[%s7 + $0x3c] sm:$0xf]
    %v2017 = vld [vmem:[%s8] sm:$0x1]
    %v2034 = vunpack.c.l.b16 %v2001
    %v2035 = vunpack.c.l.b16 %v2002
    %v2036 = vunpack.c.l.b16 %v2003
    %v2037 = vunpack.c.l.b16 %v2004
    %v2038 = vunpack.c.l.b16 %v2005
    %v2039 = vunpack.c.l.b16 %v2006
    %v2040 = vunpack.c.l.b16 %v2007
    %v2041 = vunpack.c.l.b16 %v2008
    %v2042 = vunpack.c.l.b16 %v2009
    %v2043 = vunpack.c.l.b16 %v2010
    %v2044 = vunpack.c.l.b16 %v2011
    %v2045 = vunpack.c.l.b16 %v2012
    %v2046 = vunpack.c.l.b16 %v2013
    %v2047 = vunpack.c.l.b16 %v2014
    %v2048 = vunpack.c.l.b16 %v2015
    %v2049 = vunpack.c.l.b16 %v2016
    %v2050 = vpack.c.b16 %v2035, %v2034
    %v2051 = vpack.c.b16 %v2037, %v2036
    %v2052 = vpack.c.b16 %v2039, %v2038
    %v2053 = vpack.c.b16 %v2041, %v2040
    %v2054 = vpack.c.b16 %v2043, %v2042
    %v2055 = vpack.c.b16 %v2045, %v2044
    %v2056 = vpack.c.b16 %v2047, %v2046
    %v2057 = vpack.c.b16 %v2049, %v2048
    %2066 = vmatprep.subr.bf16.mxu0 0
    %2067 = vmatpush1.bf16.msra.mxu0 %v2057
    %2068 = vmatprep.subr.bf16.mxu0 0
    %2069 = vmatpush1.bf16.msra.mxu0 %v2056
    %2070 = vmatprep.subr.bf16.mxu0 0
    %2071 = vmatpush1.bf16.msra.mxu0 %v2055
    %2072 = vmatprep.subr.bf16.mxu0 0
    %2073 = vmatpush1.bf16.msra.mxu0 %v2054
    %2074 = vmatprep.subr.bf16.mxu0 0
    %2075 = vmatpush1.bf16.msra.mxu0 %v2053
    %2076 = vmatprep.subr.bf16.mxu0 0
    %2077 = vmatpush1.bf16.msra.mxu0 %v2052
    %2078 = vmatprep.subr.bf16.mxu0 0
    %2079 = vmatpush1.bf16.msra.mxu0 %v2051
    %2080 = vmatprep.subr.bf16.mxu0 0
    %2081 = vmatpush1.bf16.msra.mxu0 %v2050
    %2082 = vmatprep.subr.bf16.mxu0 0
    %2083 = vmatpush2.bf16.msra.mxu0 0
    %2084 = vmatprep.subr.bf16.mxu0 0
    %2085 = vmatpush2.bf16.msra.mxu0 0
    %2086 = vmatprep.subr.bf16.mxu0 0
    %2087 = vmatpush2.bf16.msra.mxu0 0
    %2088 = vmatprep.subr.bf16.mxu0 0
    %2089 = vmatpush2.bf16.msra.mxu0 0
    %2090 = vmatprep.subr.bf16.mxu0 0
    %2091 = vmatpush2.bf16.msra.mxu0 0
    %2092 = vmatprep.subr.bf16.mxu0 0
    %2093 = vmatpush2.bf16.msra.mxu0 0
    %2094 = vmatprep.subr.bf16.mxu0 0
    %2095 = vmatpush2.bf16.msra.mxu0 0
    %2096 = vmatprep.subr.bf16.mxu0 0
    %2097 = vmatpush2.bf16.msra.mxu0 0
    %2098 = vmatprep.mubr.bf16.mxu0 0
    %2099 = vmatmul.mubr.bf16.gmra.mxu0 %v2000
    %v2100 = vpop.f32.mrf.mxu0
    %v2101 = vadd.f32 %v2017, %v2100
    %v2102 = vpop.f32.mrf.mxu0
    %v2103 = vpop.f32.mrf.mxu0
    %v2104 = vpop.f32.mrf.mxu0
    %2105 = vdwg.mxu0
    %v2106 = vmax.f32 %v2101, 0.0
    %v2107 = vpack.c.bf16 %v2106, %v2106
    %s2108 = scalar_lea.vmem %s7, 64
    %v2109 = vld [vmem:[%s2108] sm:$0xf]
    %v2110 = vld [vmem:[%s2108 + $0x4] sm:$0xf]
    %v2111 = vld [vmem:[%s2108 + $0x8] sm:$0xf]
    %v2112 = vld [vmem:[%s2108 + $0xc] sm:$0xf]
    %v2113 = vld [vmem:[%s2108 + $0x10] sm:$0xf]
    %v2114 = vld [vmem:[%s2108 + $0x14] sm:$0xf]
    %v2115 = vld [vmem:[%s2108 + $0x18] sm:$0xf]
    %v2116 = vld [vmem:[%s2108 + $0x1c] sm:$0xf]
    %v2117 = vld [vmem:[%s2108 + $0x20] sm:$0xf]
    %v2118 = vld [vmem:[%s2108 + $0x24] sm:$0xf]
    %v2119 = vld [vmem:[%s2108 + $0x28] sm:$0xf]
    %v2120 = vld [vmem:[%s2108 + $0x2c] sm:$0xf]
    %v2121 = vld [vmem:[%s2108 + $0x30] sm:$0xf]
    %v2122 = vld [vmem:[%s2108 + $0x34] sm:$0xf]
    %v2123 = vld [vmem:[%s2108 + $0x38] sm:$0xf]
    %v2124 = vld [vmem:[%s2108 + $0x3c] sm:$0xf]
    %v2125 = vld [vmem:[%s8 + $0x1] sm:$0x1]
    %v2142 = vunpack.c.l.b16 %v2109
    %v2143 = vunpack.c.l.b16 %v2110
    %v2144 = vunpack.c.l.b16 %v2111
    %v2145 = vunpack.c.l.b16 %v2112
    %v2146 = vunpack.c.l.b16 %v2113
    %v2147 = vunpack.c.l.b16 %v2114
    %v2148 = vunpack.c.l.b16 %v2115
    %v2149 = vunpack.c.l.b16 %v2116
    %v2150 = vunpack.c.l.b16 %v2117
    %v2151 = vunpack.c.l.b16 %v2118
    %v2152 = vunpack.c.l.b16 %v2119
    %v2153 = vunpack.c.l.b16 %v2120
    %v2154 = vunpack.c.l.b16 %v2121
    %v2155 = vunpack.c.l.b16 %v2122
    %v2156 = vunpack.c.l.b16 %v2123
    %v2157 = vunpack.c.l.b16 %v2124
    %v2158 = vpack.c.b16 %v2143, %v2142
    %v2159 = vpack.c.b16 %v2145, %v2144
    %v2160 = vpack.c.b16 %v2147, %v2146
    %v2161 = vpack.c.b16 %v2149, %v2148
    %v2162 = vpack.c.b16 %v2151, %v2150
    %v2163 = vpack.c.b16 %v2153, %v2152
    %v2164 = vpack.c.b16 %v2155, %v2154
    %v2165 = vpack.c.b16 %v2157, %v2156
    %2174 = vmatprep.subr.bf16.mxu0 0
    %2175 = vmatpush1.bf16.msra.mxu0 %v2165
    %2176 = vmatprep.subr.bf16.mxu0 0
    %2177 = vmatpush1.bf16.msra.mxu0 %v2164
    %2178 = vmatprep.subr.bf16.mxu0 0
    %2179 = vmatpush1.bf16.msra.mxu0 %v2163
    %2180 = vmatprep.subr.bf16.mxu0 0
    %2181 = vmatpush1.bf16.msra.mxu0 %v2162
    %2182 = vmatprep.subr.bf16.mxu0 0
    %2183 = vmatpush1.bf16.msra.mxu0 %v2161
    %2184 = vmatprep.subr.bf16.mxu0 0
    %2185 = vmatpush1.bf16.msra.mxu0 %v2160
    %2186 = vmatprep.subr.bf16.mxu0 0
    %2187 = vmatpush1.bf16.msra.mxu0 %v2159
    %2188 = vmatprep.subr.bf16.mxu0 0
    %2189 = vmatpush1.bf16.msra.mxu0 %v2158
    %2190 = vmatprep.subr.bf16.mxu0 0
    %2191 = vmatpush2.bf16.msra.mxu0 0
    %2192 = vmatprep.subr.bf16.mxu0 0
    %2193 = vmatpush2.bf16.msra.mxu0 0
    %2194 = vmatprep.subr.bf16.mxu0 0
    %2195 = vmatpush2.bf16.msra.mxu0 0
    %2196 = vmatprep.subr.bf16.mxu0 0
    %2197 = vmatpush2.bf16.msra.mxu0 0
    %2198 = vmatprep.subr.bf16.mxu0 0
    %2199 = vmatpush2.bf16.msra.mxu0 0
    %2200 = vmatprep.subr.bf16.mxu0 0
    %2201 = vmatpush2.bf16.msra.mxu0 0
    %2202 = vmatprep.subr.bf16.mxu0 0
    %2203 = vmatpush2.bf16.msra.mxu0 0
    %2204 = vmatprep.subr.bf16.mxu0 0
    %2205 = vmatpush2.bf16.msra.mxu0 0
    %2206 = vmatprep.mubr.bf16.mxu0 0
    %2207 = vmatmul.mubr.bf16.gmra.mxu0 %v2107
    %v2208 = vpop.f32.mrf.mxu0
    %v2209 = vadd.f32 %v2125, %v2208
    %v2210 = vpop.f32.mrf.mxu0
    %v2211 = vpop.f32.mrf.mxu0
    %v2212 = vpop.f32.mrf.mxu0
    %2213 = vdwg.mxu0
    %v2214 = vmax.f32 %v2209, 0.0
    %v2215 = vpack.c.bf16 %v2214, %v2214
    %s2216 = scalar_lea.vmem %s7, 128
    %v2217 = vld [vmem:[%s2216] sm:$0xf]
    %v2218 = vld [vmem:[%s2216 + $0x4] sm:$0xf]
    %v2219 = vld [vmem:[%s2216 + $0x8] sm:$0xf]
    %v2220 = vld [vmem:[%s2216 + $0xc] sm:$0xf]
    %v2221 = vld [vmem:[%s2216 + $0x10] sm:$0xf]
    %v2222 = vld [vmem:[%s2216 + $0x14] sm:$0xf]
    %v2223 = vld [vmem:[%s2216 + $0x18] sm:$0xf]
    %v2224 = vld [vmem:[%s2216 + $0x1c] sm:$0xf]
    %v2225 = vld [vmem:[%s2216 + $0x20] sm:$0xf]
    %v2226 = vld [vmem:[%s2216 + $0x24] sm:$0xf]
    %v2227 = vld [vmem:[%s2216 + $0x28] sm:$0xf]
    %v2228 = vld [vmem:[%s2216 + $0x2c] sm:$0xf]
    %v2229 = vld [vmem:[%s2216 + $0x30] sm:$0xf]
    %v2230 = vld [vmem:[%s2216 + $0x34] sm:$0xf]
    %v2231 = vld [vmem:[%s2216 + $0x38] sm:$0xf]
    %v2232 = vld [vmem:[%s2216 + $0x3c] sm:$0xf]
    %v2233 = vld [vmem:[%s8 + $0x2] sm:$0x1]
    %v2250 = vunpack.c.l.b16 %v2217
    %v2251 = vunpack.c.l.b16 %v2218
    %v2252 = vunpack.c.l.b16 %v2219
    %v2253 = vunpack.c.l.b16 %v2220
    %v2254 = vunpack.c.l.b16 %v2221
    %v2255 = vunpack.c.l.b16 %v2222
    %v2256 = vunpack.c.l.b16 %v2223
    %v2257 = vunpack.c.l.b16 %v2224
    %v2258 = vunpack.c.l.b16 %v2225
    %v2259 = vunpack.c.l.b16 %v2226
    %v2260 = vunpack.c.l.b16 %v2227
    %v2261 = vunpack.c.l.b16 %v2228
    %v2262 = vunpack.c.l.b16 %v2229
    %v2263 = vunpack.c.l.b16 %v2230
    %v2264 = vunpack.c.l.b16 %v2231
    %v2265 = vunpack.c.l.b16 %v2232
    %v2266 = vpack.c.b16 %v2251, %v2250
    %v2267 = vpack.c.b16 %v2253, %v2252
    %v2268 = vpack.c.b16 %v2255, %v2254
    %v2269 = vpack.c.b16 %v2257, %v2256
    %v2270 = vpack.c.b16 %v2259, %v2258
    %v2271 = vpack.c.b16 %v2261, %v2260
    %v2272 = vpack.c.b16 %v2263, %v2262
    %v2273 = vpack.c.b16 %v2265, %v2264
    %2282 = vmatprep.subr.bf16.mxu0 0
    %2283 = vmatpush1.bf16.msra.mxu0 %v2273
    %2284 = vmatprep.subr.bf16.mxu0 0
    %2285 = vmatpush1.bf16.msra.mxu0 %v2272
    %2286 = vmatprep.subr.bf16.mxu0 0
    %2287 = vmatpush1.bf16.msra.mxu0 %v2271
    %2288 = vmatprep.subr.bf16.mxu0 0
    %2289 = vmatpush1.bf16.msra.mxu0 %v2270
    %2290 = vmatprep.subr.bf16.mxu0 0
    %2291 = vmatpush1.bf16.msra.mxu0 %v2269
    %2292 = vmatprep.subr.bf16.mxu0 0
    %2293 = vmatpush1.bf16.msra.mxu0 %v2268
    %2294 = vmatprep.subr.bf16.mxu0 0
    %2295 = vmatpush1.bf16.msra.mxu0 %v2267
    %2296 = vmatprep.subr.bf16.mxu0 0
    %2297 = vmatpush1.bf16.msra.mxu0 %v2266
    %2298 = vmatprep.subr.bf16.mxu0 0
    %2299 = vmatpush2.bf16.msra.mxu0 0
    %2300 = vmatprep.subr.bf16.mxu0 0
    %2301 = vmatpush2.bf16.msra.mxu0 0
    %2302 = vmatprep.subr.bf16.mxu0 0
    %2303 = vmatpush2.bf16.msra.mxu0 0
    %2304 = vmatprep.subr.bf16.mxu0 0
    %2305 = vmatpush2.bf16.msra.mxu0 0
    %2306 = vmatprep.subr.bf16.mxu0 0
    %2307 = vmatpush2.bf16.msra.mxu0 0
    %2308 = vmatprep.subr.bf16.mxu0 0
    %2309 = vmatpush2.bf16.msra.mxu0 0
    %2310 = vmatprep.subr.bf16.mxu0 0
    %2311 = vmatpush2.bf16.msra.mxu0 0
    %2312 = vmatprep.subr.bf16.mxu0 0
    %2313 = vmatpush2.bf16.msra.mxu0 0
    %2314 = vmatprep.mubr.bf16.mxu0 0
    %2315 = vmatmul.mubr.bf16.gmra.mxu0 %v2215
    %v2316 = vpop.f32.mrf.mxu0
    %v2317 = vadd.f32 %v2233, %v2316
    %v2318 = vpop.f32.mrf.mxu0
    %v2319 = vpop.f32.mrf.mxu0
    %v2320 = vpop.f32.mrf.mxu0
    %2321 = vdwg.mxu0
    %vm2322 = vcmask 32768
    %2323 = vst.msk [vmem:[#allocation4] sm:$0x1] %vm2322, %v2317
    // Predicated region
    $region38: #{classifier_forward.1} parent=1 // pred_check
      _
    $region39: #{classifier_forward.1} parent=1 // pred_check_branch
      %2325 = sbr.rel (0) target = $region41
    $region40: #{classifier_forward.1} parent=1 // pred_region
      %s2327 = ssub.s32 16, 16
      %2328 = vsyncadd [#allocation5], %s2327
      %s2330 = sshll.u32 [#allocation4], 4
      %s2331 = int_to_ptr.vmem [resolvable:$true] %s2330
      %2333 = dma.vmem_to_hbm [thread:$0]  %s2331, 16, %s9, [#allocation5]
    $region41: #{classifier_forward.1} parent=1 // pred_fallthru
      _
    // Predicated region
    $region42: #{classifier_forward.1} parent=1 // pred_check
      _
    $region43: #{classifier_forward.1} parent=1 // pred_check_branch
      %2335 = sbr.rel (0) target = $region45
    $region44: #{classifier_forward.1} parent=1 // pred_region
      %2336 = dma.done [#allocation5], 16
    $region45: #{classifier_forward.1} parent=1 // pred_fallthru
      _
    %2337 = vsyncpa [#allocation5], 1

</llo_original>
